<compile_context>
chip_gen: v7x
topology: tpu7x:2x2x1
jax: 0.10.0
libtpu: 0.0.40
codegen_flags: <defaults>
</compile_context>

<pallas_src>
import jax
import jax.numpy as jnp
import numpy as np
from jax.experimental import pallas as pl
from jax.experimental.pallas import tpu as pltpu

EMB_DIM = 32
NUM_HEADS = 4
HEAD_DIM = EMB_DIM // NUM_HEADS
NEG_INF = -1e30


def _qgen_kernel(fs_ref, tf_ref, mask_ref,
                 wq_ref, bq_ref, wkv_ref, bkv_ref, wfin_ref, bfin_ref,
                 q_out_ref, attn_out_ref):
    """One grid step handles TB batch elements. All matmuls on the MXU (f32 acc)."""
    TB, V, E = fs_ref.shape
    L = tf_ref.shape[1]
    H = NUM_HEADS
    hd = E // H

    # Flatten batch into sublanes for the projection matmuls (leading-dim
    # reshapes only -> layout-free).
    fs2 = fs_ref[...].reshape(TB * V, E)          # (TB*V, E)
    tf2 = tf_ref[...].reshape(TB * L, E)          # (TB*L, E)

    # Fused projections: weights are (in, out), biases (1, out). The 1/sqrt(hd)
    # scale is already folded into the q weights/bias.
    q2 = jnp.dot(fs2, wq_ref[...], preferred_element_type=jnp.float32) + bq_ref[...]
    kv2 = jnp.dot(tf2, wkv_ref[...], preferred_element_type=jnp.float32) + bkv_ref[...]

    q3 = q2.reshape(TB, V, E)
    k3 = kv2[:, :E].reshape(TB, L, E)
    v3 = kv2[:, E:].reshape(TB, L, E)

    # Hoisted mask broadcast (0 keep / NEG_INF drop), shared by all heads.
    addmask = jnp.broadcast_to(mask_ref[...], (TB, V, L))

    q_acc = None       # accumulated final projection (pre-bias), (TB*V, E)
    attn_sum = None    # sum of per-head attention probabilities, (TB, V, L)
    for h in range(H):                            # static unroll, batched over TB
        sl = slice(h * hd, (h + 1) * hd)
        # Scores: batched over TB, no materialized transpose of K.
        s = jnp.einsum('bvd,bld->bvl', q3[:, :, sl], k3[:, :, sl],
                       preferred_element_type=jnp.float32)        # (TB, V, L)
        s = s + addmask                                            # key_padding_mask
        s = s - jnp.max(s, axis=-1, keepdims=True)
        e = jnp.exp(s)
        p = e / jnp.sum(e, axis=-1, keepdims=True)
        pv = jnp.einsum('bvl,bld->bvd', p, v3[:, :, sl],
                        preferred_element_type=jnp.float32)       # (TB, V, hd)
        # Fold this head's output straight through its row slab of the fused
        # final weight (== concat-then-matmul, without the lane concatenate).
        contrib = jnp.dot(pv.reshape(TB * V, hd), wfin_ref[sl, :],
                          preferred_element_type=jnp.float32)     # (TB*V, E)
        q_acc = contrib if q_acc is None else q_acc + contrib
        attn_sum = p if attn_sum is None else attn_sum + p

    queries2 = q_acc + bfin_ref[...]
    q_out_ref[...] = queries2.reshape(TB, V, E)
    attn_out_ref[...] = attn_sum * (1.0 / float(H))   # torch: mean over heads


def _pick_tb(B, V):
    """Batch elements per grid step: fill MXU rows (aim TB*V ~ 128) but keep
    >=2 grid steps when possible so v7x's second TensorCore gets work."""
    target = max(1, 128 // max(V, 1))
    cands = [tb for tb in range(1, B + 1) if B % tb == 0]
    pref = [tb for tb in cands if tb <= target and B // tb >= 2]
    if pref:
        return max(pref)
    capped = [tb for tb in cands if tb <= target]
    return max(capped) if capped else 1


def query_generation_forward(fs, t_feat, params, t_mask=None):
    """fs: (B, V, E), t_feat: (B, L, E), t_mask: optional bool (B, L), True = ignore."""
    B, V, E = fs.shape
    L = t_feat.shape[1]
    w_lin, b_lin, w_in, b_in, w_out, b_out = params
    hd = E // NUM_HEADS
    scale = 1.0 / float(np.sqrt(hd))

    wq, wkv = w_in[:E], w_in[E:]
    bq, bkv = b_in[:E], b_in[E:]

    # Exact weight reassociation of the shared Linear into the projections,
    # done once outside the kernel. All passed in (in, out) layout so the
    # kernel never transposes.
    wq_f = ((wq @ w_lin) * scale).T                       # (E, E)
    bq_f = ((b_lin @ wq.T + bq) * scale).reshape(1, E)
    wkv_f = (wkv @ w_lin).T                               # (E, 2E)
    bkv_f = (b_lin @ wkv.T + bkv).reshape(1, 2 * E)
    wfin_f = (w_lin @ w_out).T                            # (E, E)
    bfin_f = (b_out @ w_lin.T + b_lin).reshape(1, E)

    if t_mask is None:
        addmask = jnp.zeros((B, 1, L), jnp.float32)
    else:
        addmask = jnp.where(t_mask, NEG_INF, 0.0).astype(jnp.float32).reshape(B, 1, L)

    TB = _pick_tb(B, V)
    grid = (B // TB,)

    grid_spec = pltpu.PrefetchScalarGridSpec(
        num_scalar_prefetch=0,
        grid=grid,
        in_specs=[
            pl.BlockSpec((TB, V, E), lambda b: (b, 0, 0)),     # fs
            pl.BlockSpec((TB, L, E), lambda b: (b, 0, 0)),     # t_feat
            pl.BlockSpec((TB, 1, L), lambda b: (b, 0, 0)),     # additive mask
            pl.BlockSpec((E, E), lambda b: (0, 0)),            # fused q weight (scaled)
            pl.BlockSpec((1, E), lambda b: (0, 0)),            # fused q bias
            pl.BlockSpec((E, 2 * E), lambda b: (0, 0)),        # fused kv weight
            pl.BlockSpec((1, 2 * E), lambda b: (0, 0)),        # fused kv bias
            pl.BlockSpec((E, E), lambda b: (0, 0)),            # fused final weight
            pl.BlockSpec((1, E), lambda b: (0, 0)),            # fused final bias
        ],
        out_specs=[
            pl.BlockSpec((TB, V, E), lambda b: (b, 0, 0)),     # queries
            pl.BlockSpec((TB, V, L), lambda b: (b, 0, 0)),     # attn weights (head-avg)
        ],
    )

    queries, attn_w = pl.pallas_call(
        _qgen_kernel,
        out_shape=(
            jax.ShapeDtypeStruct((B, V, E), jnp.float32),
            jax.ShapeDtypeStruct((B, V, L), jnp.float32),
        ),
        grid_spec=grid_spec,
        compiler_params=pltpu.CompilerParams(
            dimension_semantics=("parallel",)),
    )(fs, t_feat, addmask, wq_f, bq_f, wkv_f, bkv_f, wfin_f, bfin_f)
    return queries, attn_w


def reference_forward(fs, t_feat, params, t_mask=None):
    """Pure-JAX reference matching torch semantics (eval mode, avg attn weights)."""
    w_lin, b_lin, w_in, b_in, w_out, b_out = params
    B, V, E = fs.shape
    L = t_feat.shape[1]
    H, hd = NUM_HEADS, HEAD_DIM

    lin = lambda x: x @ w_lin.T + b_lin
    fs_l, tf_l = lin(fs), lin(t_feat)

    q = fs_l @ w_in[:E].T + b_in[:E]
    k = tf_l @ w_in[E:2 * E].T + b_in[E:2 * E]
    v = tf_l @ w_in[2 * E:].T + b_in[2 * E:]

    q = q.reshape(B, V, H, hd).transpose(0, 2, 1, 3) / np.sqrt(hd)
    k = k.reshape(B, L, H, hd).transpose(0, 2, 1, 3)
    v = v.reshape(B, L, H, hd).transpose(0, 2, 1, 3)

    s = jnp.einsum('bhvd,bhld->bhvl', q, k)
    if t_mask is not None:
        s = s + jnp.where(t_mask, NEG_INF, 0.0)[:, None, None, :]
    p = jax.nn.softmax(s, axis=-1)
    o = jnp.einsum('bhvl,bhld->bhvd', p, v).transpose(0, 2, 1, 3).reshape(B, V, E)

    attn_o = o @ w_out.T + b_out
    queries = attn_o @ w_lin.T + b_lin
    return queries, p.mean(axis=1)


def init_params(key, emb_dim):
    ks = jax.random.split(key, 6)
    w_lin = 0.05 * jax.random.normal(ks[0], (emb_dim, emb_dim), jnp.float32)
    b_lin = 0.05 * jax.random.normal(ks[1], (emb_dim,), jnp.float32)
    w_in = 0.05 * jax.random.normal(ks[2], (3 * emb_dim, emb_dim), jnp.float32)
    b_in = 0.05 * jax.random.normal(ks[3], (3 * emb_dim,), jnp.float32)
    w_out = 0.05 * jax.random.normal(ks[4], (emb_dim, emb_dim), jnp.float32)
    b_out = 0.05 * jax.random.normal(ks[5], (emb_dim,), jnp.float32)
    return (w_lin, b_lin, w_in, b_in, w_out, b_out)


if __name__ == "__main__":
    B, V, L, E = 2, 8, 8, EMB_DIM

    key = jax.random.PRNGKey(0)
    k_fs, k_tf, k_p = jax.random.split(key, 3)
    fs = jax.random.normal(k_fs, (B, V, E), jnp.float32)
    t_feat = jax.random.normal(k_tf, (B, L, E), jnp.float32)
    # key_padding_mask (True = ignore): mask the last 2 tokens of batch 1
    t_mask = jnp.array([[False] * L,
                        [False] * (L - 2) + [True] * 2])
    params = init_params(k_p, E)

    queries, attn_w = query_generation_forward(fs, t_feat, params, t_mask)
    queries = jax.block_until_ready(queries)
    attn_w = jax.block_until_ready(attn_w)

    q_ref, a_ref = reference_forward(fs, t_feat, params, t_mask)
    np.testing.assert_allclose(np.asarray(queries), np.asarray(q_ref),
                               rtol=1e-4, atol=1e-4)
    np.testing.assert_allclose(np.asarray(attn_w), np.asarray(a_ref),
                               rtol=1e-4, atol=1e-4)

    print("KERNEL_OK")
</pallas_src>

<mosaic_0001>
module attributes {stable_mosaic.version = 11 : i64} {
  func.func @_qgen_kernel(%arg0: i32, %arg1: memref<1x8x32xf32, #tpu.memory_space<vmem>>, %arg2: memref<1x8x32xf32, #tpu.memory_space<vmem>>, %arg3: memref<1x1x8xf32, #tpu.memory_space<vmem>>, %arg4: memref<32x32xf32, #tpu.memory_space<vmem>>, %arg5: memref<1x32xf32, #tpu.memory_space<vmem>>, %arg6: memref<32x64xf32, #tpu.memory_space<vmem>>, %arg7: memref<1x64xf32, #tpu.memory_space<vmem>>, %arg8: memref<32x32xf32, #tpu.memory_space<vmem>>, %arg9: memref<1x32xf32, #tpu.memory_space<vmem>>, %arg10: memref<1x8x32xf32, #tpu.memory_space<vmem>>, %arg11: memref<1x8x8xf32, #tpu.memory_space<vmem>>) attributes {dimension_semantics = [#tpu.dimension_semantics<parallel>], iteration_bounds = array<i64: 2>, scalar_prefetch = 0 : i64, scratch_operands = 0 : i64, tpu.core_type = #tpu.core_type<tc>, window_params = [{transform_indices = @transform_0, window_bounds = array<i64: 1, 8, 32>}, {transform_indices = @transform_1, window_bounds = array<i64: 1, 8, 32>}, {transform_indices = @transform_2, window_bounds = array<i64: 1, 1, 8>}, {pipeline_mode = #tpu.pipeline_mode<synchronous>, transform_indices = @transform_3, window_bounds = array<i64: 32, 32>}, {pipeline_mode = #tpu.pipeline_mode<synchronous>, transform_indices = @transform_4, window_bounds = array<i64: 1, 32>}, {pipeline_mode = #tpu.pipeline_mode<synchronous>, transform_indices = @transform_5, window_bounds = array<i64: 32, 64>}, {pipeline_mode = #tpu.pipeline_mode<synchronous>, transform_indices = @transform_6, window_bounds = array<i64: 1, 64>}, {pipeline_mode = #tpu.pipeline_mode<synchronous>, transform_indices = @transform_7, window_bounds = array<i64: 32, 32>}, {pipeline_mode = #tpu.pipeline_mode<synchronous>, transform_indices = @transform_8, window_bounds = array<i64: 1, 32>}, {transform_indices = @transform_9, window_bounds = array<i64: 1, 8, 32>}, {transform_indices = @transform_10, window_bounds = array<i64: 1, 8, 8>}]} {
    %c0 = arith.constant 0 : index
    %c0_0 = arith.constant 0 : index
    %c0_1 = arith.constant 0 : index
    %0 = vector.load %arg1[%c0, %c0_0, %c0_1] : memref<1x8x32xf32, #tpu.memory_space<vmem>>, vector<1x8x32xf32>
    %1 = vector.shape_cast %0 : vector<1x8x32xf32> to vector<8x32xf32>
    %c0_2 = arith.constant 0 : index
    %c0_3 = arith.constant 0 : index
    %c0_4 = arith.constant 0 : index
    %2 = vector.load %arg2[%c0_2, %c0_3, %c0_4] : memref<1x8x32xf32, #tpu.memory_space<vmem>>, vector<1x8x32xf32>
    %3 = vector.shape_cast %2 : vector<1x8x32xf32> to vector<8x32xf32>
    %c0_5 = arith.constant 0 : index
    %c0_6 = arith.constant 0 : index
    %4 = vector.load %arg4[%c0_5, %c0_6] : memref<32x32xf32, #tpu.memory_space<vmem>>, vector<32x32xf32>
    %cst = arith.constant dense<0.000000e+00> : vector<8x32xf32>
    %5 = tpu.matmul %1, %4, %cst {dimension_numbers = #tpu.dot_dimension_numbers<[1], [0], [0], [1], [0, 0, 1, 1], [], []>} : vector<8x32xf32>, vector<32x32xf32>, vector<8x32xf32> -> vector<8x32xf32>
    %c0_7 = arith.constant 0 : index
    %c0_8 = arith.constant 0 : index
    %6 = vector.load %arg5[%c0_7, %c0_8] : memref<1x32xf32, #tpu.memory_space<vmem>>, vector<1x32xf32>
    %7 = vector.broadcast %6 : vector<1x32xf32> to vector<8x32xf32>
    %8 = arith.addf %5, %7 : vector<8x32xf32>
    %c0_9 = arith.constant 0 : index
    %c0_10 = arith.constant 0 : index
    %9 = vector.load %arg6[%c0_9, %c0_10] : memref<32x64xf32, #tpu.memory_space<vmem>>, vector<32x64xf32>
    %cst_11 = arith.constant dense<0.000000e+00> : vector<8x64xf32>
    %10 = tpu.matmul %3, %9, %cst_11 {dimension_numbers = #tpu.dot_dimension_numbers<[1], [0], [0], [1], [0, 0, 1, 1], [], []>} : vector<8x32xf32>, vector<32x64xf32>, vector<8x64xf32> -> vector<8x64xf32>
    %c0_12 = arith.constant 0 : index
    %c0_13 = arith.constant 0 : index
    %11 = vector.load %arg7[%c0_12, %c0_13] : memref<1x64xf32, #tpu.memory_space<vmem>>, vector<1x64xf32>
    %12 = vector.broadcast %11 : vector<1x64xf32> to vector<8x64xf32>
    %13 = arith.addf %10, %12 : vector<8x64xf32>
    %14 = vector.shape_cast %8 : vector<8x32xf32> to vector<1x8x32xf32>
    %15 = vector.extract_strided_slice %13 {offsets = [0, 0], sizes = [8, 32], strides = [1, 1]} : vector<8x64xf32> to vector<8x32xf32>
    %16 = vector.shape_cast %15 : vector<8x32xf32> to vector<1x8x32xf32>
    %17 = vector.extract_strided_slice %13 {offsets = [0, 32], sizes = [8, 32], strides = [1, 1]} : vector<8x64xf32> to vector<8x32xf32>
    %18 = vector.shape_cast %17 : vector<8x32xf32> to vector<1x8x32xf32>
    %c0_14 = arith.constant 0 : index
    %c0_15 = arith.constant 0 : index
    %c0_16 = arith.constant 0 : index
    %19 = vector.load %arg3[%c0_14, %c0_15, %c0_16] : memref<1x1x8xf32, #tpu.memory_space<vmem>>, vector<1x1x8xf32>
    %20 = vector.shape_cast %19 : vector<1x1x8xf32> to vector<1x1x8xf32>
    %21 = vector.broadcast %20 : vector<1x1x8xf32> to vector<1x8x8xf32>
    %22 = vector.extract_strided_slice %14 {offsets = [0, 0, 0], sizes = [1, 8, 8], strides = [1, 1, 1]} : vector<1x8x32xf32> to vector<1x8x8xf32>
    %23 = vector.extract_strided_slice %16 {offsets = [0, 0, 0], sizes = [1, 8, 8], strides = [1, 1, 1]} : vector<1x8x32xf32> to vector<1x8x8xf32>
    "tpu.trace_start"() <{level = 10 : i32, message = "bvd,bld->bvl"}> : () -> ()
    %cst_17 = arith.constant dense<0.000000e+00> : vector<1x8x8xf32>
    %24 = tpu.matmul %22, %23, %cst_17 {dimension_numbers = #tpu.dot_dimension_numbers<[2], [2], [1], [1], [0, 0, 0, 1, 1, 1], [0], [0]>} : vector<1x8x8xf32>, vector<1x8x8xf32>, vector<1x8x8xf32> -> vector<1x8x8xf32>
    "tpu.trace_stop"() : () -> ()
    %25 = arith.addf %24, %21 : vector<1x8x8xf32>
    %cst_18 = arith.constant dense<0xFF800000> : vector<1x8xf32>
    %26 = vector.multi_reduction <maximumf>, %25, %cst_18 [2] : vector<1x8x8xf32> to vector<1x8xf32>
    %27 = vector.shape_cast %26 : vector<1x8xf32> to vector<1x8x1xf32>
    %28 = vector.broadcast %27 : vector<1x8x1xf32> to vector<1x8x8xf32>
    %29 = arith.subf %25, %28 : vector<1x8x8xf32>
    %30 = math.exp %29 : vector<1x8x8xf32>
    %cst_19 = arith.constant dense<0.000000e+00> : vector<1x8xf32>
    %31 = vector.multi_reduction <add>, %30, %cst_19 [2] : vector<1x8x8xf32> to vector<1x8xf32>
    %32 = vector.shape_cast %31 : vector<1x8xf32> to vector<1x8x1xf32>
    %33 = vector.broadcast %32 : vector<1x8x1xf32> to vector<1x8x8xf32>
    %34 = arith.divf %30, %33 : vector<1x8x8xf32>
    %35 = vector.extract_strided_slice %18 {offsets = [0, 0, 0], sizes = [1, 8, 8], strides = [1, 1, 1]} : vector<1x8x32xf32> to vector<1x8x8xf32>
    "tpu.trace_start"() <{level = 10 : i32, message = "bvl,bld->bvd"}> : () -> ()
    %cst_20 = arith.constant dense<0.000000e+00> : vector<1x8x8xf32>
    %36 = tpu.matmul %34, %35, %cst_20 {dimension_numbers = #tpu.dot_dimension_numbers<[2], [1], [1], [2], [0, 0, 0, 1, 1, 2], [0], [0]>} : vector<1x8x8xf32>, vector<1x8x8xf32>, vector<1x8x8xf32> -> vector<1x8x8xf32>
    "tpu.trace_stop"() : () -> ()
    %37 = vector.shape_cast %36 : vector<1x8x8xf32> to vector<8x8xf32>
    %c0_21 = arith.constant 0 : index
    %c0_22 = arith.constant 0 : index
    %38 = vector.load %arg8[%c0_21, %c0_22] : memref<32x32xf32, #tpu.memory_space<vmem>>, vector<8x32xf32>
    %cst_23 = arith.constant dense<0.000000e+00> : vector<8x32xf32>
    %39 = tpu.matmul %37, %38, %cst_23 {dimension_numbers = #tpu.dot_dimension_numbers<[1], [0], [0], [1], [0, 0, 1, 1], [], []>} : vector<8x8xf32>, vector<8x32xf32>, vector<8x32xf32> -> vector<8x32xf32>
    %40 = vector.extract_strided_slice %14 {offsets = [0, 0, 8], sizes = [1, 8, 8], strides = [1, 1, 1]} : vector<1x8x32xf32> to vector<1x8x8xf32>
    %41 = vector.extract_strided_slice %16 {offsets = [0, 0, 8], sizes = [1, 8, 8], strides = [1, 1, 1]} : vector<1x8x32xf32> to vector<1x8x8xf32>
    "tpu.trace_start"() <{level = 10 : i32, message = "bvd,bld->bvl"}> : () -> ()
    %cst_24 = arith.constant dense<0.000000e+00> : vector<1x8x8xf32>
    %42 = tpu.matmul %40, %41, %cst_24 {dimension_numbers = #tpu.dot_dimension_numbers<[2], [2], [1], [1], [0, 0, 0, 1, 1, 1], [0], [0]>} : vector<1x8x8xf32>, vector<1x8x8xf32>, vector<1x8x8xf32> -> vector<1x8x8xf32>
    "tpu.trace_stop"() : () -> ()
    %43 = arith.addf %42, %21 : vector<1x8x8xf32>
    %cst_25 = arith.constant dense<0xFF800000> : vector<1x8xf32>
    %44 = vector.multi_reduction <maximumf>, %43, %cst_25 [2] : vector<1x8x8xf32> to vector<1x8xf32>
    %45 = vector.shape_cast %44 : vector<1x8xf32> to vector<1x8x1xf32>
    %46 = vector.broadcast %45 : vector<1x8x1xf32> to vector<1x8x8xf32>
    %47 = arith.subf %43, %46 : vector<1x8x8xf32>
    %48 = math.exp %47 : vector<1x8x8xf32>
    %cst_26 = arith.constant dense<0.000000e+00> : vector<1x8xf32>
    %49 = vector.multi_reduction <add>, %48, %cst_26 [2] : vector<1x8x8xf32> to vector<1x8xf32>
    %50 = vector.shape_cast %49 : vector<1x8xf32> to vector<1x8x1xf32>
    %51 = vector.broadcast %50 : vector<1x8x1xf32> to vector<1x8x8xf32>
    %52 = arith.divf %48, %51 : vector<1x8x8xf32>
    %53 = vector.extract_strided_slice %18 {offsets = [0, 0, 8], sizes = [1, 8, 8], strides = [1, 1, 1]} : vector<1x8x32xf32> to vector<1x8x8xf32>
    "tpu.trace_start"() <{level = 10 : i32, message = "bvl,bld->bvd"}> : () -> ()
    %cst_27 = arith.constant dense<0.000000e+00> : vector<1x8x8xf32>
    %54 = tpu.matmul %52, %53, %cst_27 {dimension_numbers = #tpu.dot_dimension_numbers<[2], [1], [1], [2], [0, 0, 0, 1, 1, 2], [0], [0]>} : vector<1x8x8xf32>, vector<1x8x8xf32>, vector<1x8x8xf32> -> vector<1x8x8xf32>
    "tpu.trace_stop"() : () -> ()
    %55 = vector.shape_cast %54 : vector<1x8x8xf32> to vector<8x8xf32>
    %c8 = arith.constant 8 : index
    %c0_28 = arith.constant 0 : index
    %56 = vector.load %arg8[%c8, %c0_28] : memref<32x32xf32, #tpu.memory_space<vmem>>, vector<8x32xf32>
    %cst_29 = arith.constant dense<0.000000e+00> : vector<8x32xf32>
    %57 = tpu.matmul %55, %56, %cst_29 {dimension_numbers = #tpu.dot_dimension_numbers<[1], [0], [0], [1], [0, 0, 1, 1], [], []>} : vector<8x8xf32>, vector<8x32xf32>, vector<8x32xf32> -> vector<8x32xf32>
    %58 = arith.addf %39, %57 : vector<8x32xf32>
    %59 = arith.addf %34, %52 : vector<1x8x8xf32>
    %60 = vector.extract_strided_slice %14 {offsets = [0, 0, 16], sizes = [1, 8, 8], strides = [1, 1, 1]} : vector<1x8x32xf32> to vector<1x8x8xf32>
    %61 = vector.extract_strided_slice %16 {offsets = [0, 0, 16], sizes = [1, 8, 8], strides = [1, 1, 1]} : vector<1x8x32xf32> to vector<1x8x8xf32>
    "tpu.trace_start"() <{level = 10 : i32, message = "bvd,bld->bvl"}> : () -> ()
    %cst_30 = arith.constant dense<0.000000e+00> : vector<1x8x8xf32>
    %62 = tpu.matmul %60, %61, %cst_30 {dimension_numbers = #tpu.dot_dimension_numbers<[2], [2], [1], [1], [0, 0, 0, 1, 1, 1], [0], [0]>} : vector<1x8x8xf32>, vector<1x8x8xf32>, vector<1x8x8xf32> -> vector<1x8x8xf32>
    "tpu.trace_stop"() : () -> ()
    %63 = arith.addf %62, %21 : vector<1x8x8xf32>
    %cst_31 = arith.constant dense<0xFF800000> : vector<1x8xf32>
    %64 = vector.multi_reduction <maximumf>, %63, %cst_31 [2] : vector<1x8x8xf32> to vector<1x8xf32>
    %65 = vector.shape_cast %64 : vector<1x8xf32> to vector<1x8x1xf32>
    %66 = vector.broadcast %65 : vector<1x8x1xf32> to vector<1x8x8xf32>
    %67 = arith.subf %63, %66 : vector<1x8x8xf32>
    %68 = math.exp %67 : vector<1x8x8xf32>
    %cst_32 = arith.constant dense<0.000000e+00> : vector<1x8xf32>
    %69 = vector.multi_reduction <add>, %68, %cst_32 [2] : vector<1x8x8xf32> to vector<1x8xf32>
    %70 = vector.shape_cast %69 : vector<1x8xf32> to vector<1x8x1xf32>
    %71 = vector.broadcast %70 : vector<1x8x1xf32> to vector<1x8x8xf32>
    %72 = arith.divf %68, %71 : vector<1x8x8xf32>
    %73 = vector.extract_strided_slice %18 {offsets = [0, 0, 16], sizes = [1, 8, 8], strides = [1, 1, 1]} : vector<1x8x32xf32> to vector<1x8x8xf32>
    "tpu.trace_start"() <{level = 10 : i32, message = "bvl,bld->bvd"}> : () -> ()
    %cst_33 = arith.constant dense<0.000000e+00> : vector<1x8x8xf32>
    %74 = tpu.matmul %72, %73, %cst_33 {dimension_numbers = #tpu.dot_dimension_numbers<[2], [1], [1], [2], [0, 0, 0, 1, 1, 2], [0], [0]>} : vector<1x8x8xf32>, vector<1x8x8xf32>, vector<1x8x8xf32> -> vector<1x8x8xf32>
    "tpu.trace_stop"() : () -> ()
    %75 = vector.shape_cast %74 : vector<1x8x8xf32> to vector<8x8xf32>
    %c16 = arith.constant 16 : index
    %c0_34 = arith.constant 0 : index
    %76 = vector.load %arg8[%c16, %c0_34] : memref<32x32xf32, #tpu.memory_space<vmem>>, vector<8x32xf32>
    %cst_35 = arith.constant dense<0.000000e+00> : vector<8x32xf32>
    %77 = tpu.matmul %75, %76, %cst_35 {dimension_numbers = #tpu.dot_dimension_numbers<[1], [0], [0], [1], [0, 0, 1, 1], [], []>} : vector<8x8xf32>, vector<8x32xf32>, vector<8x32xf32> -> vector<8x32xf32>
    %78 = arith.addf %58, %77 : vector<8x32xf32>
    %79 = arith.addf %59, %72 : vector<1x8x8xf32>
    %80 = vector.extract_strided_slice %14 {offsets = [0, 0, 24], sizes = [1, 8, 8], strides = [1, 1, 1]} : vector<1x8x32xf32> to vector<1x8x8xf32>
    %81 = vector.extract_strided_slice %16 {offsets = [0, 0, 24], sizes = [1, 8, 8], strides = [1, 1, 1]} : vector<1x8x32xf32> to vector<1x8x8xf32>
    "tpu.trace_start"() <{level = 10 : i32, message = "bvd,bld->bvl"}> : () -> ()
    %cst_36 = arith.constant dense<0.000000e+00> : vector<1x8x8xf32>
    %82 = tpu.matmul %80, %81, %cst_36 {dimension_numbers = #tpu.dot_dimension_numbers<[2], [2], [1], [1], [0, 0, 0, 1, 1, 1], [0], [0]>} : vector<1x8x8xf32>, vector<1x8x8xf32>, vector<1x8x8xf32> -> vector<1x8x8xf32>
    "tpu.trace_stop"() : () -> ()
    %83 = arith.addf %82, %21 : vector<1x8x8xf32>
    %cst_37 = arith.constant dense<0xFF800000> : vector<1x8xf32>
    %84 = vector.multi_reduction <maximumf>, %83, %cst_37 [2] : vector<1x8x8xf32> to vector<1x8xf32>
    %85 = vector.shape_cast %84 : vector<1x8xf32> to vector<1x8x1xf32>
    %86 = vector.broadcast %85 : vector<1x8x1xf32> to vector<1x8x8xf32>
    %87 = arith.subf %83, %86 : vector<1x8x8xf32>
    %88 = math.exp %87 : vector<1x8x8xf32>
    %cst_38 = arith.constant dense<0.000000e+00> : vector<1x8xf32>
    %89 = vector.multi_reduction <add>, %88, %cst_38 [2] : vector<1x8x8xf32> to vector<1x8xf32>
    %90 = vector.shape_cast %89 : vector<1x8xf32> to vector<1x8x1xf32>
    %91 = vector.broadcast %90 : vector<1x8x1xf32> to vector<1x8x8xf32>
    %92 = arith.divf %88, %91 : vector<1x8x8xf32>
    %93 = vector.extract_strided_slice %18 {offsets = [0, 0, 24], sizes = [1, 8, 8], strides = [1, 1, 1]} : vector<1x8x32xf32> to vector<1x8x8xf32>
    "tpu.trace_start"() <{level = 10 : i32, message = "bvl,bld->bvd"}> : () -> ()
    %cst_39 = arith.constant dense<0.000000e+00> : vector<1x8x8xf32>
    %94 = tpu.matmul %92, %93, %cst_39 {dimension_numbers = #tpu.dot_dimension_numbers<[2], [1], [1], [2], [0, 0, 0, 1, 1, 2], [0], [0]>} : vector<1x8x8xf32>, vector<1x8x8xf32>, vector<1x8x8xf32> -> vector<1x8x8xf32>
    "tpu.trace_stop"() : () -> ()
    %95 = vector.shape_cast %94 : vector<1x8x8xf32> to vector<8x8xf32>
    %c24 = arith.constant 24 : index
    %c0_40 = arith.constant 0 : index
    %96 = vector.load %arg8[%c24, %c0_40] : memref<32x32xf32, #tpu.memory_space<vmem>>, vector<8x32xf32>
    %cst_41 = arith.constant dense<0.000000e+00> : vector<8x32xf32>
    %97 = tpu.matmul %95, %96, %cst_41 {dimension_numbers = #tpu.dot_dimension_numbers<[1], [0], [0], [1], [0, 0, 1, 1], [], []>} : vector<8x8xf32>, vector<8x32xf32>, vector<8x32xf32> -> vector<8x32xf32>
    %98 = arith.addf %78, %97 : vector<8x32xf32>
    %99 = arith.addf %79, %92 : vector<1x8x8xf32>
    %c0_42 = arith.constant 0 : index
    %c0_43 = arith.constant 0 : index
    %100 = vector.load %arg9[%c0_42, %c0_43] : memref<1x32xf32, #tpu.memory_space<vmem>>, vector<1x32xf32>
    %101 = vector.broadcast %100 : vector<1x32xf32> to vector<8x32xf32>
    %102 = arith.addf %98, %101 : vector<8x32xf32>
    %103 = vector.shape_cast %102 : vector<8x32xf32> to vector<1x8x32xf32>
    %c0_44 = arith.constant 0 : index
    %c0_45 = arith.constant 0 : index
    %c0_46 = arith.constant 0 : index
    %104 = vector.load %arg10[%c0_44, %c0_45, %c0_46] : memref<1x8x32xf32, #tpu.memory_space<vmem>>, vector<1x8x32xf32>
    tpu.vector_store %arg10[%c0_44, %c0_45, %c0_46], %103 {strides = array<i32>} : memref<1x8x32xf32, #tpu.memory_space<vmem>>, vector<1x8x32xf32>,
    %cst_47 = arith.constant 2.500000e-01 : f32
    %105 = vector.broadcast %cst_47 : f32 to vector<1x8x8xf32>
    %106 = arith.mulf %99, %105 : vector<1x8x8xf32>
    %c0_48 = arith.constant 0 : index
    %c0_49 = arith.constant 0 : index
    %c0_50 = arith.constant 0 : index
    %107 = vector.load %arg11[%c0_48, %c0_49, %c0_50] : memref<1x8x8xf32, #tpu.memory_space<vmem>>, vector<1x8x8xf32>
    tpu.vector_store %arg11[%c0_48, %c0_49, %c0_50], %106 {strides = array<i32>} : memref<1x8x8xf32, #tpu.memory_space<vmem>>, vector<1x8x8xf32>,
    return
  }
  func.func @transform_0(%arg0: i32) -> (i32, i32, i32) {
    %c0_i32 = arith.constant 0 : i32
    %c0_i32_0 = arith.constant 0 : i32
    %c0_i32_1 = arith.constant 0 : i32
    return %arg0, %c0_i32, %c0_i32_0 : i32, i32, i32
  }
  func.func @transform_1(%arg0: i32) -> (i32, i32, i32) {
    %c0_i32 = arith.constant 0 : i32
    %c0_i32_0 = arith.constant 0 : i32
    %c0_i32_1 = arith.constant 0 : i32
    return %arg0, %c0_i32, %c0_i32_0 : i32, i32, i32
  }
  func.func @transform_2(%arg0: i32) -> (i32, i32, i32) {
    %c0_i32 = arith.constant 0 : i32
    %c0_i32_0 = arith.constant 0 : i32
    %c0_i32_1 = arith.constant 0 : i32
    return %arg0, %c0_i32, %c0_i32_0 : i32, i32, i32
  }
  func.func @transform_3(%arg0: i32) -> (i32, i32) {
    %c0_i32 = arith.constant 0 : i32
    %c0_i32_0 = arith.constant 0 : i32
    %c0_i32_1 = arith.constant 0 : i32
    return %c0_i32, %c0_i32_0 : i32, i32
  }
  func.func @transform_4(%arg0: i32) -> (i32, i32) {
    %c0_i32 = arith.constant 0 : i32
    %c0_i32_0 = arith.constant 0 : i32
    %c0_i32_1 = arith.constant 0 : i32
    return %c0_i32, %c0_i32_0 : i32, i32
  }
  func.func @transform_5(%arg0: i32) -> (i32, i32) {
    %c0_i32 = arith.constant 0 : i32
    %c0_i32_0 = arith.constant 0 : i32
    %c0_i32_1 = arith.constant 0 : i32
    return %c0_i32, %c0_i32_0 : i32, i32
  }
  func.func @transform_6(%arg0: i32) -> (i32, i32) {
    %c0_i32 = arith.constant 0 : i32
    %c0_i32_0 = arith.constant 0 : i32
    %c0_i32_1 = arith.constant 0 : i32
    return %c0_i32, %c0_i32_0 : i32, i32
  }
  func.func @transform_7(%arg0: i32) -> (i32, i32) {
    %c0_i32 = arith.constant 0 : i32
    %c0_i32_0 = arith.constant 0 : i32
    %c0_i32_1 = arith.constant 0 : i32
    return %c0_i32, %c0_i32_0 : i32, i32
  }
  func.func @transform_8(%arg0: i32) -> (i32, i32) {
    %c0_i32 = arith.constant 0 : i32
    %c0_i32_0 = arith.constant 0 : i32
    %c0_i32_1 = arith.constant 0 : i32
    return %c0_i32, %c0_i32_0 : i32, i32
  }
  func.func @transform_9(%arg0: i32) -> (i32, i32, i32) {
    %c0_i32 = arith.constant 0 : i32
    %c0_i32_0 = arith.constant 0 : i32
    %c0_i32_1 = arith.constant 0 : i32
    return %arg0, %c0_i32, %c0_i32_0 : i32, i32, i32
  }
  func.func @transform_10(%arg0: i32) -> (i32, i32, i32) {
    %c0_i32 = arith.constant 0 : i32
    %c0_i32_0 = arith.constant 0 : i32
    %c0_i32_1 = arith.constant 0 : i32
    return %arg0, %c0_i32, %c0_i32_0 : i32, i32, i32
  }
}

</mosaic_0001>

<llo_original>
// kernel: tpu_custom_call.1
$region0: #{tpu_custom_call.1}
  #allocation0 [shape = 'u32[]', space=smem, size = 0x4, offset = 0x4, fixed_abs, tag = 'smem constant byte address 0x4 - core index']
  #allocation1 [shape = 'u32[144,128]{1,0:T(1,128)}', space=vmem, size = 0x12000, scoped, tag = 'internal scratch']
  %s0 = inlined_call_operand.hbm [shape: f32[2,8,32], index: 0, kind: input, shape index: {}]
  %s1 = inlined_call_operand.hbm [shape: f32[2,8,32], index: 1, kind: input, shape index: {}]
  %s2 = inlined_call_operand.vmem [shape: f32[2,1,8], index: 2, kind: input, shape index: {}]
  %s3 = inlined_call_operand.hbm [shape: f32[32,32], index: 3, kind: input, shape index: {}]
  %s4 = inlined_call_operand.vmem [shape: f32[1,32], index: 4, kind: input, shape index: {}]
  %s5 = inlined_call_operand.hbm [shape: f32[32,64], index: 5, kind: input, shape index: {}]
  %s6 = inlined_call_operand.vmem [shape: f32[1,64], index: 6, kind: input, shape index: {}]
  %s7 = inlined_call_operand.hbm [shape: f32[32,32], index: 7, kind: input, shape index: {}]
  %s8 = inlined_call_operand.vmem [shape: f32[1,32], index: 8, kind: input, shape index: {}]
  %s9 = inlined_call_operand.hbm [shape: f32[2,8,32], index: 9, kind: output, shape index: {0}]
  %s10 = inlined_call_operand.hbm [shape: f32[2,8,8], index: 10, kind: output, shape index: {1}]
  %11 = xla_tuple %s9, %s10
  %s12 = sld [smem:[#allocation0]]
  $region97: #{tpu_custom_call.1} parent=0
    _
  %s14 = ssub.s32 1, %s12
  %s15 = scalar_select 0, %s14, %s12
  $region1: #{tpu_custom_call.1} parent=0
    #allocation2 [shape = 'u8[8192]{0}', space=vmem, size = 0x2000, scoped, tag = 'input window, operand 0']
    #allocation3 [shape = 's32[2]{0}', space=sflag, size = 0x8, scoped, tag = 'scoped memory for tpu_custom_call.1']
    #allocation4 [shape = 's32[2]{0}', space=sflag, size = 0x8, scoped, tag = 'scoped memory for tpu_custom_call.1']
    #allocation5 [shape = 'u8[8192]{0}', space=vmem, size = 0x2000, scoped, tag = 'input window, operand 1']
    #allocation6 [shape = 's32[2]{0}', space=sflag, size = 0x8, scoped, tag = 'scoped memory for tpu_custom_call.1']
    #allocation7 [shape = 'u8[16384]{0}', space=vmem, size = 0x4000, scoped, tag = 'input window, operand 3, single buffered']
    #allocation8 [shape = 'u8[16384]{0}', space=vmem, size = 0x4000, scoped, tag = 'input window, operand 5, single buffered']
    #allocation9 [shape = 's32[1]{0}', space=sflag, size = 0x4, scoped, tag = 'scoped memory for tpu_custom_call.1']
    #allocation10 [shape = 'u8[16384]{0}', space=vmem, size = 0x4000, scoped, tag = 'input window, operand 7, single buffered']
    #allocation11 [shape = 'u8[8192]{0}', space=vmem, size = 0x2000, scoped, tag = 'output window, operand 0']
    #allocation12 [shape = 'u8[8192]{0}', space=vmem, size = 0x2000, scoped, tag = 'output window, operand 1']
    #allocation13 [shape = 's32[2]{0}', space=sflag, size = 0x8, scoped, tag = 'scoped memory for tpu_custom_call.1']
    %16 = vsyncpa [#allocation3], 0
    %s17 = scalar_lea.sflag [#allocation3], 1
    %18 = vsyncpa %s17, 0
    %19 = vsyncpa [#allocation6], 0
    %s20 = scalar_lea.sflag [#allocation6], 1
    %21 = vsyncpa %s20, 0
    %22 = vsyncpa [#allocation9], 0
    %23 = vsyncpa [#allocation4], 0
    %s24 = scalar_lea.sflag [#allocation4], 1
    %25 = vsyncpa %s24, 0
    %26 = vsyncpa [#allocation13], 0
    %s27 = scalar_lea.sflag [#allocation13], 1
    %28 = vsyncpa %s27, 0
    loop: start=0, step=1, limit=4
    $region2: #{tpu_custom_call.1} parent=1 // loop_pre_header
      _
    $region3: #{tpu_custom_call.1} parent=1 // loop_header
      %s30 = sphi 0, %s34
      %p31 = scmp.ge.s32.totalorder %s30, 4
      %s40 = sphi 0, %s42
      %s43 = sphi 0, %s40
      %s44 = sphi 0, %s43
      %s60 = sphi 0, %s44
      %s66 = sphi 0, %s68
      %s69 = sphi 0, %s66
      %s70 = sphi 0, %s69
      %s86 = sphi 0, %s70
      %s92 = sphi 0, %s94
      %s95 = sphi 0, %s92
      %s96 = sphi 0, %s95
      %s112 = sphi 0, %s96
      %s116 = sphi 0, %s116
      %s118 = sphi 0, %s116
      %s119 = sphi 0, %s118
      %s133 = sphi 0, %s119
      %s137 = sphi 0, %s137
      %s139 = sphi 0, %s137
      %s140 = sphi 0, %s139
      %s154 = sphi 0, %s140
      %s158 = sphi 0, %s158
      %s160 = sphi 0, %s158
      %s161 = sphi 0, %s160
      %s175 = sphi 0, %s161
      %s179 = sphi 0, %s179
      %s181 = sphi 0, %s179
      %s182 = sphi 0, %s181
      %s196 = sphi 0, %s182
      %s200 = sphi 0, %s200
      %s202 = sphi 0, %s200
      %s203 = sphi 0, %s202
      %s217 = sphi 0, %s203
      %s221 = sphi 0, %s221
      %s223 = sphi 0, %s221
      %s224 = sphi 0, %s223
      %s238 = sphi 0, %s224
      %s244 = sphi 0, %s246
      %s247 = sphi 0, %s244
      %s248 = sphi 0, %s247
      %s264 = sphi 0, %s248
      %s270 = sphi 0, %s272
      %s273 = sphi 0, %s270
      %s274 = sphi 0, %s273
      %s290 = sphi 0, %s274
    $region4: #{tpu_custom_call.1} parent=1 // loop_header_branch
      %33 = sbr.rel (%p31) target = $region8
    $region5: #{tpu_custom_call.1} parent=1 // loop_body
      %s35 = ssub.s32 %s30, 1
      %s36 = ssub.s32 %s30, 2
      %s37 = sadd.s32 %s30, 1
      %s38 = ssub.s32 %s30, %s37
      %p39 = scmp.eq.s32.totalorder %s38, 0
      %s41 = sadd.s32 %s40, 1
      %s42 = scalar_select %p39, %s40, %s41
      %p45 = pneg %p39
      %p46 = scmp.eq.s32.totalorder %s30, 1
      %p47 = por %p45, %p46
      %p48 = scmp.ne.s32.totalorder %s40, %s43
      %p49 = scmp.eq.s32.totalorder %s30, 0
      %p50 = por %p48, %p49
      %p51 = scmp.ne.s32.totalorder %s40, %s43
      %p52 = scmp.eq.s32.totalorder %s35, 1
      %p53 = por %p51, %p52
      %p54 = scmp.ne.s32.totalorder %s43, %s44
      %p55 = scmp.eq.s32.totalorder %s35, 0
      %p56 = por %p54, %p55
      %p57 = scmp.ne.s32.totalorder %s43, %s44
      %p58 = scmp.eq.s32.totalorder %s36, 1
      %p59 = por %p57, %p58
      %p61 = scmp.ne.s32.totalorder %s44, %s60
      %p62 = scmp.eq.s32.totalorder %s36, 0
      %p63 = por %p61, %p62
      %s64 = ssub.s32 %s30, %s37
      %p65 = scmp.eq.s32.totalorder %s64, 0
      %s67 = sadd.s32 %s66, 1
      %s68 = scalar_select %p65, %s66, %s67
      %p71 = pneg %p65
      %p72 = scmp.eq.s32.totalorder %s30, 1
      %p73 = por %p71, %p72
      %p74 = scmp.ne.s32.totalorder %s66, %s69
      %p75 = scmp.eq.s32.totalorder %s30, 0
      %p76 = por %p74, %p75
      %p77 = scmp.ne.s32.totalorder %s66, %s69
      %p78 = scmp.eq.s32.totalorder %s35, 1
      %p79 = por %p77, %p78
      %p80 = scmp.ne.s32.totalorder %s69, %s70
      %p81 = scmp.eq.s32.totalorder %s35, 0
      %p82 = por %p80, %p81
      %p83 = scmp.ne.s32.totalorder %s69, %s70
      %p84 = scmp.eq.s32.totalorder %s36, 1
      %p85 = por %p83, %p84
      %p87 = scmp.ne.s32.totalorder %s70, %s86
      %p88 = scmp.eq.s32.totalorder %s36, 0
      %p89 = por %p87, %p88
      %s90 = ssub.s32 %s30, %s37
      %p91 = scmp.eq.s32.totalorder %s90, 0
      %s93 = sadd.s32 %s92, 1
      %s94 = scalar_select %p91, %s92, %s93
      %p97 = pneg %p91
      %p98 = scmp.eq.s32.totalorder %s30, 1
      %p99 = por %p97, %p98
      %p100 = scmp.ne.s32.totalorder %s92, %s95
      %p101 = scmp.eq.s32.totalorder %s30, 0
      %p102 = por %p100, %p101
      %p103 = scmp.ne.s32.totalorder %s92, %s95
      %p104 = scmp.eq.s32.totalorder %s35, 1
      %p105 = por %p103, %p104
      %p106 = scmp.ne.s32.totalorder %s95, %s96
      %p107 = scmp.eq.s32.totalorder %s35, 0
      %p108 = por %p106, %p107
      %p109 = scmp.ne.s32.totalorder %s95, %s96
      %p110 = scmp.eq.s32.totalorder %s36, 1
      %p111 = por %p109, %p110
      %p113 = scmp.ne.s32.totalorder %s96, %s112
      %p114 = scmp.eq.s32.totalorder %s36, 0
      %p115 = por %p113, %p114
      %s117 = sadd.s32 %s116, 1
      %p120 = scmp.eq.s32.totalorder %s30, 1
      %p121 = scmp.ne.s32.totalorder %s116, %s118
      %p122 = scmp.eq.s32.totalorder %s30, 0
      %p123 = por %p121, %p122
      %p124 = scmp.ne.s32.totalorder %s116, %s118
      %p125 = scmp.eq.s32.totalorder %s35, 1
      %p126 = por %p124, %p125
      %p127 = scmp.ne.s32.totalorder %s118, %s119
      %p128 = scmp.eq.s32.totalorder %s35, 0
      %p129 = por %p127, %p128
      %p130 = scmp.ne.s32.totalorder %s118, %s119
      %p131 = scmp.eq.s32.totalorder %s36, 1
      %p132 = por %p130, %p131
      %p134 = scmp.ne.s32.totalorder %s119, %s133
      %p135 = scmp.eq.s32.totalorder %s36, 0
      %p136 = por %p134, %p135
      %s138 = sadd.s32 %s137, 1
      %p141 = scmp.eq.s32.totalorder %s30, 1
      %p142 = scmp.ne.s32.totalorder %s137, %s139
      %p143 = scmp.eq.s32.totalorder %s30, 0
      %p144 = por %p142, %p143
      %p145 = scmp.ne.s32.totalorder %s137, %s139
      %p146 = scmp.eq.s32.totalorder %s35, 1
      %p147 = por %p145, %p146
      %p148 = scmp.ne.s32.totalorder %s139, %s140
      %p149 = scmp.eq.s32.totalorder %s35, 0
      %p150 = por %p148, %p149
      %p151 = scmp.ne.s32.totalorder %s139, %s140
      %p152 = scmp.eq.s32.totalorder %s36, 1
      %p153 = por %p151, %p152
      %p155 = scmp.ne.s32.totalorder %s140, %s154
      %p156 = scmp.eq.s32.totalorder %s36, 0
      %p157 = por %p155, %p156
      %s159 = sadd.s32 %s158, 1
      %p162 = scmp.eq.s32.totalorder %s30, 1
      %p163 = scmp.ne.s32.totalorder %s158, %s160
      %p164 = scmp.eq.s32.totalorder %s30, 0
      %p165 = por %p163, %p164
      %p166 = scmp.ne.s32.totalorder %s158, %s160
      %p167 = scmp.eq.s32.totalorder %s35, 1
      %p168 = por %p166, %p167
      %p169 = scmp.ne.s32.totalorder %s160, %s161
      %p170 = scmp.eq.s32.totalorder %s35, 0
      %p171 = por %p169, %p170
      %p172 = scmp.ne.s32.totalorder %s160, %s161
      %p173 = scmp.eq.s32.totalorder %s36, 1
      %p174 = por %p172, %p173
      %p176 = scmp.ne.s32.totalorder %s161, %s175
      %p177 = scmp.eq.s32.totalorder %s36, 0
      %p178 = por %p176, %p177
      %s180 = sadd.s32 %s179, 1
      %p183 = scmp.eq.s32.totalorder %s30, 1
      %p184 = scmp.ne.s32.totalorder %s179, %s181
      %p185 = scmp.eq.s32.totalorder %s30, 0
      %p186 = por %p184, %p185
      %p187 = scmp.ne.s32.totalorder %s179, %s181
      %p188 = scmp.eq.s32.totalorder %s35, 1
      %p189 = por %p187, %p188
      %p190 = scmp.ne.s32.totalorder %s181, %s182
      %p191 = scmp.eq.s32.totalorder %s35, 0
      %p192 = por %p190, %p191
      %p193 = scmp.ne.s32.totalorder %s181, %s182
      %p194 = scmp.eq.s32.totalorder %s36, 1
      %p195 = por %p193, %p194
      %p197 = scmp.ne.s32.totalorder %s182, %s196
      %p198 = scmp.eq.s32.totalorder %s36, 0
      %p199 = por %p197, %p198
      %s201 = sadd.s32 %s200, 1
      %p204 = scmp.eq.s32.totalorder %s30, 1
      %p205 = scmp.ne.s32.totalorder %s200, %s202
      %p206 = scmp.eq.s32.totalorder %s30, 0
      %p207 = por %p205, %p206
      %p208 = scmp.ne.s32.totalorder %s200, %s202
      %p209 = scmp.eq.s32.totalorder %s35, 1
      %p210 = por %p208, %p209
      %p211 = scmp.ne.s32.totalorder %s202, %s203
      %p212 = scmp.eq.s32.totalorder %s35, 0
      %p213 = por %p211, %p212
      %p214 = scmp.ne.s32.totalorder %s202, %s203
      %p215 = scmp.eq.s32.totalorder %s36, 1
      %p216 = por %p214, %p215
      %p218 = scmp.ne.s32.totalorder %s203, %s217
      %p219 = scmp.eq.s32.totalorder %s36, 0
      %p220 = por %p218, %p219
      %s222 = sadd.s32 %s221, 1
      %p225 = scmp.eq.s32.totalorder %s30, 1
      %p226 = scmp.ne.s32.totalorder %s221, %s223
      %p227 = scmp.eq.s32.totalorder %s30, 0
      %p228 = por %p226, %p227
      %p229 = scmp.ne.s32.totalorder %s221, %s223
      %p230 = scmp.eq.s32.totalorder %s35, 1
      %p231 = por %p229, %p230
      %p232 = scmp.ne.s32.totalorder %s223, %s224
      %p233 = scmp.eq.s32.totalorder %s35, 0
      %p234 = por %p232, %p233
      %p235 = scmp.ne.s32.totalorder %s223, %s224
      %p236 = scmp.eq.s32.totalorder %s36, 1
      %p237 = por %p235, %p236
      %p239 = scmp.ne.s32.totalorder %s224, %s238
      %p240 = scmp.eq.s32.totalorder %s36, 0
      %p241 = por %p239, %p240
      %s242 = ssub.s32 %s30, %s37
      %p243 = scmp.eq.s32.totalorder %s242, 0
      %s245 = sadd.s32 %s244, 1
      %s246 = scalar_select %p243, %s244, %s245
      %p249 = pneg %p243
      %p250 = scmp.eq.s32.totalorder %s30, 1
      %p251 = por %p249, %p250
      %p252 = scmp.ne.s32.totalorder %s244, %s247
      %p253 = scmp.eq.s32.totalorder %s30, 0
      %p254 = por %p252, %p253
      %p255 = scmp.ne.s32.totalorder %s244, %s247
      %p256 = scmp.eq.s32.totalorder %s35, 1
      %p257 = por %p255, %p256
      %p258 = scmp.ne.s32.totalorder %s247, %s248
      %p259 = scmp.eq.s32.totalorder %s35, 0
      %p260 = por %p258, %p259
      %p261 = scmp.ne.s32.totalorder %s247, %s248
      %p262 = scmp.eq.s32.totalorder %s36, 1
      %p263 = por %p261, %p262
      %p265 = scmp.ne.s32.totalorder %s248, %s264
      %p266 = scmp.eq.s32.totalorder %s36, 0
      %p267 = por %p265, %p266
      %s268 = ssub.s32 %s30, %s37
      %p269 = scmp.eq.s32.totalorder %s268, 0
      %s271 = sadd.s32 %s270, 1
      %s272 = scalar_select %p269, %s270, %s271
      %p275 = pneg %p269
      %p276 = scmp.eq.s32.totalorder %s30, 1
      %p277 = por %p275, %p276
      %p278 = scmp.ne.s32.totalorder %s270, %s273
      %p279 = scmp.eq.s32.totalorder %s30, 0
      %p280 = por %p278, %p279
      %p281 = scmp.ne.s32.totalorder %s270, %s273
      %p282 = scmp.eq.s32.totalorder %s35, 1
      %p283 = por %p281, %p282
      %p284 = scmp.ne.s32.totalorder %s273, %s274
      %p285 = scmp.eq.s32.totalorder %s35, 0
      %p286 = por %p284, %p285
      %p287 = scmp.ne.s32.totalorder %s273, %s274
      %p288 = scmp.eq.s32.totalorder %s36, 1
      %p289 = por %p287, %p288
      %p291 = scmp.ne.s32.totalorder %s274, %s290
      %p292 = scmp.eq.s32.totalorder %s36, 0
      %p293 = por %p291, %p292
      %p294 = scmp.le.s32.totalorder 1, %s30
      %p295 = scmp.lt.s32.totalorder %s30, 3
      %p296 = pnand %p294, %p295
      %p297 = pneg %p296
      // Predicated region
      $region9: #{tpu_custom_call.1} parent=5 // pred_check
        _
      $region10: #{tpu_custom_call.1} parent=5 // pred_check_branch
        %299 = sbr.rel (%p296) target = $region12
      $region11: #{tpu_custom_call.1} parent=5 // pred_region
        %s300 = ssub.s32 %s30, 1
        // Predicated region
        $region13: #{tpu_custom_call.1} parent=11 // pred_check
          %p301 = pneg %p129
        $region14: #{tpu_custom_call.1} parent=11 // pred_check_branch
          %303 = sbr.rel (%p301) target = $region16
        $region15: #{tpu_custom_call.1} parent=11 // pred_region
          %s305 = ssub.s32 512, 512
          %306 = vsyncadd [#allocation6], %s305
          %s307 = sshll.u32 [#allocation7], 4
          %s308 = int_to_ptr.vmem [resolvable:$true] %s307
          %313 = dma.hbm_to_vmem [thread:$0]  %s3, 512, %s308, [#allocation6], 128, 128, 8
        $region16: #{tpu_custom_call.1} parent=11 // pred_fallthru
          _
        // Predicated region
        $region17: #{tpu_custom_call.1} parent=11 // pred_check
          %p314 = pneg %p150
        $region18: #{tpu_custom_call.1} parent=11 // pred_check_branch
          %316 = sbr.rel (%p314) target = $region20
        $region19: #{tpu_custom_call.1} parent=11 // pred_region
          _
        $region20: #{tpu_custom_call.1} parent=11 // pred_fallthru
          _
        // Predicated region
        $region21: #{tpu_custom_call.1} parent=11 // pred_check
          %p317 = pneg %p171
        $region22: #{tpu_custom_call.1} parent=11 // pred_check_branch
          %319 = sbr.rel (%p317) target = $region24
        $region23: #{tpu_custom_call.1} parent=11 // pred_region
          %s321 = ssub.s32 512, 512
          %322 = vsyncadd [#allocation9], %s321
          %s323 = sshll.u32 [#allocation8], 4
          %s324 = int_to_ptr.vmem [resolvable:$true] %s323
          %329 = dma.hbm_to_vmem [thread:$0]  %s5, 512, %s324, [#allocation9], 128, 128, 8
        $region24: #{tpu_custom_call.1} parent=11 // pred_fallthru
          _
        // Predicated region
        $region25: #{tpu_custom_call.1} parent=11 // pred_check
          %p330 = pneg %p192
        $region26: #{tpu_custom_call.1} parent=11 // pred_check_branch
          %332 = sbr.rel (%p330) target = $region28
        $region27: #{tpu_custom_call.1} parent=11 // pred_region
          _
        $region28: #{tpu_custom_call.1} parent=11 // pred_fallthru
          _
        // Predicated region
        $region29: #{tpu_custom_call.1} parent=11 // pred_check
          %p333 = pneg %p213
        $region30: #{tpu_custom_call.1} parent=11 // pred_check_branch
          %335 = sbr.rel (%p333) target = $region32
        $region31: #{tpu_custom_call.1} parent=11 // pred_region
          %s337 = ssub.s32 512, 512
          %338 = vsyncadd [#allocation9], %s337
          %s339 = sshll.u32 [#allocation10], 4
          %s340 = int_to_ptr.vmem [resolvable:$true] %s339
          %345 = dma.hbm_to_vmem [thread:$0]  %s7, 512, %s340, [#allocation9], 128, 128, 8
        $region32: #{tpu_custom_call.1} parent=11 // pred_fallthru
          _
        // Predicated region
        $region33: #{tpu_custom_call.1} parent=11 // pred_check
          %p346 = pneg %p234
        $region34: #{tpu_custom_call.1} parent=11 // pred_check_branch
          %348 = sbr.rel (%p346) target = $region36
        $region35: #{tpu_custom_call.1} parent=11 // pred_region
          _
        $region36: #{tpu_custom_call.1} parent=11 // pred_fallthru
          _
      $region12: #{tpu_custom_call.1} parent=5 // pred_fallthru
        _
      %p349 = scmp.lt.s32.totalorder %s30, 2
      // Predicated region
      $region37: #{tpu_custom_call.1} parent=5 // pred_check
        %p350 = pneg %p349
      $region38: #{tpu_custom_call.1} parent=5 // pred_check_branch
        %352 = sbr.rel (%p350) target = $region40
      $region39: #{tpu_custom_call.1} parent=5 // pred_region
        // Predicated region
        $region41: #{tpu_custom_call.1} parent=39 // pred_check
          %p353 = pneg %p50
        $region42: #{tpu_custom_call.1} parent=39 // pred_check_branch
          %355 = sbr.rel (%p353) target = $region44
        $region43: #{tpu_custom_call.1} parent=39 // pred_region
          %s356 = sand.u32 %s40, 1
          %s357 = scalar_lea.sflag [#allocation3], %s356
          %s358 = sand.u32 %s40, 1
          %s359 = smul.addr %s358, 8
          %s360 = scalar_lea.vmem [#allocation2], %s359
          %s362 = ssub.s32 128, 128
          %363 = vsyncadd %s357, %s362
          %s364 = smul.addr %s30, 128
          %s365 = scalar_lea.hbm %s0, %s364
          %s367 = sshll.u32 %s360, 4
          %s368 = int_to_ptr.vmem [resolvable:$true] %s367
          %370 = dma.hbm_to_vmem [thread:$0]  %s365, 128, %s368, %s357
        $region44: #{tpu_custom_call.1} parent=39 // pred_fallthru
          _
        // Predicated region
        $region45: #{tpu_custom_call.1} parent=39 // pred_check
          %p371 = pneg %p76
        $region46: #{tpu_custom_call.1} parent=39 // pred_check_branch
          %373 = sbr.rel (%p371) target = $region48
        $region47: #{tpu_custom_call.1} parent=39 // pred_region
          %s374 = sand.u32 %s30, 1
          %s375 = scalar_lea.sflag [#allocation6], %s374
          %s376 = sand.u32 %s66, 1
          %s377 = smul.addr %s376, 8
          %s378 = scalar_lea.vmem [#allocation5], %s377
          %s380 = ssub.s32 128, 128
          %381 = vsyncadd %s375, %s380
          %s382 = smul.addr %s30, 128
          %s383 = scalar_lea.hbm %s1, %s382
          %s385 = sshll.u32 %s378, 4
          %s386 = int_to_ptr.vmem [resolvable:$true] %s385
          %388 = dma.hbm_to_vmem [thread:$0]  %s383, 128, %s386, %s375
        $region48: #{tpu_custom_call.1} parent=39 // pred_fallthru
          _
        // Predicated region
        $region49: #{tpu_custom_call.1} parent=39 // pred_check
          %p389 = pneg %p102
        $region50: #{tpu_custom_call.1} parent=39 // pred_check_branch
          %391 = sbr.rel (%p389) target = $region52
        $region51: #{tpu_custom_call.1} parent=39 // pred_region
          %p392 = scmp.lt.s32.totalorder %s30, 1
          %s393 = scalar_select %p392, %s30, 1
          %s394 = scalar_lea.vmem %s2, %s393
        $region52: #{tpu_custom_call.1} parent=39 // pred_fallthru
          _
      $region40: #{tpu_custom_call.1} parent=5 // pred_fallthru
        _
      %p395 = scmp.le.s32.totalorder 1, %s30
      %p396 = scmp.lt.s32.totalorder %s30, 3
      %p397 = pnand %p395, %p396
      %p398 = pneg %p397
      // Predicated region
      $region53: #{tpu_custom_call.1} parent=5 // pred_check
        _
      $region54: #{tpu_custom_call.1} parent=5 // pred_check_branch
        %400 = sbr.rel (%p397) target = $region56
      $region55: #{tpu_custom_call.1} parent=5 // pred_region
        %s401 = ssub.s32 %s30, 1
        %s402 = sand.u32 %s43, 1
        %s403 = scalar_lea.sflag [#allocation3], %s402
        %s404 = sand.u32 %s43, 1
        %s405 = smul.addr %s404, 8
        %s406 = scalar_lea.vmem [#allocation2], %s405
        // Predicated region
        $region57: #{tpu_custom_call.1} parent=55 // pred_check
          %p407 = pneg %p56
        $region58: #{tpu_custom_call.1} parent=55 // pred_check_branch
          %409 = sbr.rel (%p407) target = $region60
        $region59: #{tpu_custom_call.1} parent=55 // pred_region
          %410 = dma.done %s403, 128
        $region60: #{tpu_custom_call.1} parent=55 // pred_fallthru
          _
        %s411 = sand.u32 %s35, 1
        %s412 = scalar_lea.sflag [#allocation6], %s411
        %s413 = sand.u32 %s69, 1
        %s414 = smul.addr %s413, 8
        %s415 = scalar_lea.vmem [#allocation5], %s414
        // Predicated region
        $region61: #{tpu_custom_call.1} parent=55 // pred_check
          %p416 = pneg %p82
        $region62: #{tpu_custom_call.1} parent=55 // pred_check_branch
          %418 = sbr.rel (%p416) target = $region64
        $region63: #{tpu_custom_call.1} parent=55 // pred_region
          %419 = dma.done %s412, 128
        $region64: #{tpu_custom_call.1} parent=55 // pred_fallthru
          _
        // Predicated region
        $region65: #{tpu_custom_call.1} parent=55 // pred_check
          %p420 = pneg %p129
        $region66: #{tpu_custom_call.1} parent=55 // pred_check_branch
          %422 = sbr.rel (%p420) target = $region68
        $region67: #{tpu_custom_call.1} parent=55 // pred_region
          %423 = dma.done [#allocation6], 512
        $region68: #{tpu_custom_call.1} parent=55 // pred_fallthru
          _
        // Predicated region
        $region69: #{tpu_custom_call.1} parent=55 // pred_check
          %p424 = pneg %p171
        $region70: #{tpu_custom_call.1} parent=55 // pred_check_branch
          %426 = sbr.rel (%p424) target = $region72
        $region71: #{tpu_custom_call.1} parent=55 // pred_region
          %427 = dma.done [#allocation9], 512
        $region72: #{tpu_custom_call.1} parent=55 // pred_fallthru
          _
        // Predicated region
        $region73: #{tpu_custom_call.1} parent=55 // pred_check
          %p428 = pneg %p213
        $region74: #{tpu_custom_call.1} parent=55 // pred_check_branch
          %430 = sbr.rel (%p428) target = $region76
        $region75: #{tpu_custom_call.1} parent=55 // pred_region
          %431 = dma.done [#allocation9], 512
        $region76: #{tpu_custom_call.1} parent=55 // pred_fallthru
          _
        %s432 = sand.u32 %s43, 1
        %s433 = scalar_lea.sflag [#allocation3], %s432
        %s434 = sand.u32 %s43, 1
        %s435 = smul.addr %s434, 8
        %s436 = scalar_lea.vmem [#allocation2], %s435
        %p437 = pneg %p56
        %p438 = pneg %p53
        %s439 = sand.u32 %s35, 1
        %s440 = scalar_lea.sflag [#allocation6], %s439
        %s441 = sand.u32 %s69, 1
        %s442 = smul.addr %s441, 8
        %s443 = scalar_lea.vmem [#allocation5], %s442
        %p444 = pneg %p82
        %p445 = pneg %p79
        %p446 = scmp.lt.s32.totalorder %s35, 1
        %s447 = scalar_select %p446, %s35, 1
        %s448 = scalar_lea.vmem %s2, %s447
        %p449 = pneg %p108
        %p450 = pneg %p105
        %p451 = pneg %p129
        %p452 = pneg %p126
        %p453 = pneg %p150
        %p454 = pneg %p147
        %p455 = pneg %p171
        %p456 = pneg %p168
        %p457 = pneg %p192
        %p458 = pneg %p189
        %p459 = pneg %p213
        %p460 = pneg %p210
        %p461 = pneg %p234
        %p462 = pneg %p231
        %p463 = pneg %p260
        %p464 = pneg %p257
        %s465 = sand.u32 %s247, 1
        %s466 = scalar_lea.sflag [#allocation4], %s465
        %s467 = sand.u32 %s247, 1
        %s468 = smul.addr %s467, 8
        %s469 = scalar_lea.vmem [#allocation11], %s468
        %p470 = pneg %p286
        %p471 = pneg %p283
        %s472 = sand.u32 %s273, 1
        %s473 = scalar_lea.sflag [#allocation13], %s472
        %s474 = sand.u32 %s273, 1
        %s475 = smul.addr %s474, 8
        %s476 = scalar_lea.vmem [#allocation12], %s475
        %p477 = scmp.lt.s32.totalorder %s35, 1
        %s478 = scalar_select %p477, %s35, 1
        %s479 = scalar_lea.vmem %s2, %s478
        %v480 = vld [vmem:[%s406] sm:$0xff]
        %v481 = vld [vmem:[%s415] sm:$0xff]
        %v482 = vld [vmem:[#allocation7] sm:$0xff]
        %v483 = vld [vmem:[#allocation7 + $0x8] sm:$0xff]
        %v484 = vld [vmem:[#allocation7 + $0x10] sm:$0xff]
        %v485 = vld [vmem:[#allocation7 + $0x18] sm:$0xff]
        %v486 = vld [vmem:[%s4] sm:$0x1]
        %v488 = vlaneseq
        %v489 = vshrl.u32 %v488, 7
        %v490 = vsub.s32 0, %v489
        %v491 = vrot.slane %v486, %v490
        %vm493 = vcmask 261120
        %v495 = vsel %vm493, %v480, 0
        %497 = vmatprep.subr.mxu0 0.0
        %498 = vmatpush1.msra.mxu0 %v482
        %499 = vmatprep.subr.mxu0 0.0
        %500 = vmatpush1.msra.mxu0 %v483
        %501 = vmatprep.subr.mxu0 0.0
        %502 = vmatpush1.msra.mxu0 %v484
        %503 = vmatprep.subr.mxu0 0.0
        %504 = vmatpush1.msra.mxu0 %v485
        %505 = vmatprep.subr.mxu0 0.0
        %506 = vmatpush1.msra.mxu0 0.0
        %507 = vmatprep.subr.mxu0 0.0
        %508 = vmatpush1.msra.mxu0 0.0
        %509 = vmatprep.subr.mxu0 0.0
        %510 = vmatpush1.msra.mxu0 0.0
        %511 = vmatprep.subr.mxu0 0.0
        %512 = vmatpush1.msra.mxu0 0.0
        %513 = vmatprep.subr.mxu0 0.0
        %514 = vmatpush1.msra.mxu0 0.0
        %515 = vmatprep.subr.mxu0 0.0
        %516 = vmatpush1.msra.mxu0 0.0
        %517 = vmatprep.subr.mxu0 0.0
        %518 = vmatpush1.msra.mxu0 0.0
        %519 = vmatprep.subr.mxu0 0.0
        %520 = vmatpush1.msra.mxu0 0.0
        %521 = vmatprep.subr.mxu0 0.0
        %522 = vmatpush1.msra.mxu0 0.0
        %523 = vmatprep.subr.mxu0 0.0
        %524 = vmatpush1.msra.mxu0 0.0
        %525 = vmatprep.subr.mxu0 0.0
        %526 = vmatpush1.msra.mxu0 0.0
        %527 = vmatprep.subr.mxu0 0.0
        %528 = vmatpush1.msra.mxu0 0.0
        %529 = vmatprep.subr.mxu0 0.0
        %530 = vmatpush1.msra.mxu0 0.0
        %531 = vmatprep.subr.mxu0 0.0
        %532 = vmatpush1.msra.mxu0 0.0
        %533 = vmatprep.subr.mxu0 0.0
        %534 = vmatpush1.msra.mxu0 0.0
        %535 = vmatprep.subr.mxu0 0.0
        %536 = vmatpush1.msra.mxu0 0.0
        %537 = vmatprep.subr.mxu0 0.0
        %538 = vmatpush1.msra.mxu0 0.0
        %539 = vmatprep.subr.mxu0 0.0
        %540 = vmatpush1.msra.mxu0 0.0
        %541 = vmatprep.subr.mxu0 0.0
        %542 = vmatpush1.msra.mxu0 0.0
        %543 = vmatprep.subr.mxu0 0.0
        %544 = vmatpush1.msra.mxu0 0.0
        %545 = vmatprep.subr.mxu0 0.0
        %546 = vmatpush1.msra.mxu0 0.0
        %547 = vmatprep.subr.mxu0 0.0
        %548 = vmatpush1.msra.mxu0 0.0
        %549 = vmatprep.subr.mxu0 0.0
        %550 = vmatpush1.msra.mxu0 0.0
        %551 = vmatprep.subr.mxu0 0.0
        %552 = vmatpush1.msra.mxu0 0.0
        %553 = vmatprep.subr.mxu0 0.0
        %554 = vmatpush1.msra.mxu0 0.0
        %555 = vmatprep.subr.mxu0 0.0
        %556 = vmatpush1.msra.mxu0 0.0
        %557 = vmatprep.subr.mxu0 0.0
        %558 = vmatpush1.msra.mxu0 0.0
        %559 = vmatprep.subr.mxu0 0.0
        %560 = vmatpush1.msra.mxu0 0.0
        %561 = vmatprep.mubr.f32.mxu0 0.0
        %562 = vmatmul.mubr.f32.gmra.mrb[0].mxu0 %v495
        %v563 = vpop.f32.mrb[0].mxu0
        %v564 = vadd.f32 %v491, %v563
        %v565 = vpop.f32.mrb[0].mxu0
        %566 = vdwg.mxu0
        %v567 = vld [vmem:[#allocation8] sm:$0xff]
        %v568 = vld [vmem:[#allocation8 + $0x8] sm:$0xff]
        %v569 = vld [vmem:[#allocation8 + $0x10] sm:$0xff]
        %v570 = vld [vmem:[#allocation8 + $0x18] sm:$0xff]
        %v571 = vld [vmem:[%s6] sm:$0x1]
        %v573 = vlaneseq
        %v574 = vshrl.u32 %v573, 7
        %v575 = vsub.s32 0, %v574
        %v576 = vrot.slane %v571, %v575
        %v579 = vsel %vm493, %v481, 0
        %581 = vmatprep.subr.mxu0 0.0
        %582 = vmatpush1.msra.mxu0 %v567
        %583 = vmatprep.subr.mxu0 0.0
        %584 = vmatpush1.msra.mxu0 %v568
        %585 = vmatprep.subr.mxu0 0.0
        %586 = vmatpush1.msra.mxu0 %v569
        %587 = vmatprep.subr.mxu0 0.0
        %588 = vmatpush1.msra.mxu0 %v570
        %589 = vmatprep.subr.mxu0 0.0
        %590 = vmatpush1.msra.mxu0 0.0
        %591 = vmatprep.subr.mxu0 0.0
        %592 = vmatpush1.msra.mxu0 0.0
        %593 = vmatprep.subr.mxu0 0.0
        %594 = vmatpush1.msra.mxu0 0.0
        %595 = vmatprep.subr.mxu0 0.0
        %596 = vmatpush1.msra.mxu0 0.0
        %597 = vmatprep.subr.mxu0 0.0
        %598 = vmatpush1.msra.mxu0 0.0
        %599 = vmatprep.subr.mxu0 0.0
        %600 = vmatpush1.msra.mxu0 0.0
        %601 = vmatprep.subr.mxu0 0.0
        %602 = vmatpush1.msra.mxu0 0.0
        %603 = vmatprep.subr.mxu0 0.0
        %604 = vmatpush1.msra.mxu0 0.0
        %605 = vmatprep.subr.mxu0 0.0
        %606 = vmatpush1.msra.mxu0 0.0
        %607 = vmatprep.subr.mxu0 0.0
        %608 = vmatpush1.msra.mxu0 0.0
        %609 = vmatprep.subr.mxu0 0.0
        %610 = vmatpush1.msra.mxu0 0.0
        %611 = vmatprep.subr.mxu0 0.0
        %612 = vmatpush1.msra.mxu0 0.0
        %613 = vmatprep.subr.mxu0 0.0
        %614 = vmatpush1.msra.mxu0 0.0
        %615 = vmatprep.subr.mxu0 0.0
        %616 = vmatpush1.msra.mxu0 0.0
        %617 = vmatprep.subr.mxu0 0.0
        %618 = vmatpush1.msra.mxu0 0.0
        %619 = vmatprep.subr.mxu0 0.0
        %620 = vmatpush1.msra.mxu0 0.0
        %621 = vmatprep.subr.mxu0 0.0
        %622 = vmatpush1.msra.mxu0 0.0
        %623 = vmatprep.subr.mxu0 0.0
        %624 = vmatpush1.msra.mxu0 0.0
        %625 = vmatprep.subr.mxu0 0.0
        %626 = vmatpush1.msra.mxu0 0.0
        %627 = vmatprep.subr.mxu0 0.0
        %628 = vmatpush1.msra.mxu0 0.0
        %629 = vmatprep.subr.mxu0 0.0
        %630 = vmatpush1.msra.mxu0 0.0
        %631 = vmatprep.subr.mxu0 0.0
        %632 = vmatpush1.msra.mxu0 0.0
        %633 = vmatprep.subr.mxu0 0.0
        %634 = vmatpush1.msra.mxu0 0.0
        %635 = vmatprep.subr.mxu0 0.0
        %636 = vmatpush1.msra.mxu0 0.0
        %637 = vmatprep.subr.mxu0 0.0
        %638 = vmatpush1.msra.mxu0 0.0
        %639 = vmatprep.subr.mxu0 0.0
        %640 = vmatpush1.msra.mxu0 0.0
        %641 = vmatprep.subr.mxu0 0.0
        %642 = vmatpush1.msra.mxu0 0.0
        %643 = vmatprep.subr.mxu0 0.0
        %644 = vmatpush1.msra.mxu0 0.0
        %645 = vmatprep.mubr.f32.mxu0 0.0
        %646 = vmatmul.mubr.f32.gmra.mrb[0].mxu0 %v579
        %v647 = vpop.f32.mrb[0].mxu0
        %v648 = vadd.f32 %v576, %v647
        %v649 = vpop.f32.mrb[0].mxu0
        %650 = vdwg.mxu0
        %v651 = vld [vmem:[%s479] sm:$0x1]
        %v653 = vlaneseq
        %v654 = vshrl.u32 %v653, 7
        %v655 = vsub.s32 0, %v654
        %v656 = vrot.slane %v651, %v655
        %vm658 = vcmask 64512
        %v660 = vsel %vm658, %v564, 0
        %v663 = vsel %vm658, %v648, 0
        %665 = vmatprep.subr.mxu0 0.0
        %666 = vmatpush1.xpose.msra.mxu0 %v663
        %667 = vmatprep.subr.mxu0 0.0
        %668 = vmatpush1.xpose.msra.mxu0 0.0
        %669 = vmatprep.subr.mxu0 0.0
        %670 = vmatpush1.xpose.msra.mxu0 0.0
        %671 = vmatprep.subr.mxu0 0.0
        %672 = vmatpush1.xpose.msra.mxu0 0.0
        %673 = vmatprep.subr.mxu0 0.0
        %674 = vmatpush1.xpose.msra.mxu0 0.0
        %675 = vmatprep.subr.mxu0 0.0
        %676 = vmatpush1.xpose.msra.mxu0 0.0
        %677 = vmatprep.subr.mxu0 0.0
        %678 = vmatpush1.xpose.msra.mxu0 0.0
        %679 = vmatprep.subr.mxu0 0.0
        %680 = vmatpush1.xpose.msra.mxu0 0.0
        %681 = vmatprep.subr.mxu0 0.0
        %682 = vmatpush1.xpose.msra.mxu0 0.0
        %683 = vmatprep.subr.mxu0 0.0
        %684 = vmatpush1.xpose.msra.mxu0 0.0
        %685 = vmatprep.subr.mxu0 0.0
        %686 = vmatpush1.xpose.msra.mxu0 0.0
        %687 = vmatprep.subr.mxu0 0.0
        %688 = vmatpush1.xpose.msra.mxu0 0.0
        %689 = vmatprep.subr.mxu0 0.0
        %690 = vmatpush1.xpose.msra.mxu0 0.0
        %691 = vmatprep.subr.mxu0 0.0
        %692 = vmatpush1.xpose.msra.mxu0 0.0
        %693 = vmatprep.subr.mxu0 0.0
        %694 = vmatpush1.xpose.msra.mxu0 0.0
        %695 = vmatprep.subr.mxu0 0.0
        %696 = vmatpush1.xpose.msra.mxu0 0.0
        %697 = vmatprep.subr.mxu0 0.0
        %698 = vmatpush1.xpose.msra.mxu0 0.0
        %699 = vmatprep.subr.mxu0 0.0
        %700 = vmatpush1.xpose.msra.mxu0 0.0
        %701 = vmatprep.subr.mxu0 0.0
        %702 = vmatpush1.xpose.msra.mxu0 0.0
        %703 = vmatprep.subr.mxu0 0.0
        %704 = vmatpush1.xpose.msra.mxu0 0.0
        %705 = vmatprep.subr.mxu0 0.0
        %706 = vmatpush1.xpose.msra.mxu0 0.0
        %707 = vmatprep.subr.mxu0 0.0
        %708 = vmatpush1.xpose.msra.mxu0 0.0
        %709 = vmatprep.subr.mxu0 0.0
        %710 = vmatpush1.xpose.msra.mxu0 0.0
        %711 = vmatprep.subr.mxu0 0.0
        %712 = vmatpush1.xpose.msra.mxu0 0.0
        %713 = vmatprep.subr.mxu0 0.0
        %714 = vmatpush1.xpose.msra.mxu0 0.0
        %715 = vmatprep.subr.mxu0 0.0
        %716 = vmatpush1.xpose.msra.mxu0 0.0
        %717 = vmatprep.subr.mxu0 0.0
        %718 = vmatpush1.xpose.msra.mxu0 0.0
        %719 = vmatprep.subr.mxu0 0.0
        %720 = vmatpush1.xpose.msra.mxu0 0.0
        %721 = vmatprep.subr.mxu0 0.0
        %722 = vmatpush1.xpose.msra.mxu0 0.0
        %723 = vmatprep.subr.mxu0 0.0
        %724 = vmatpush1.xpose.msra.mxu0 0.0
        %725 = vmatprep.subr.mxu0 0.0
        %726 = vmatpush1.xpose.msra.mxu0 0.0
        %727 = vmatprep.subr.mxu0 0.0
        %728 = vmatpush1.xpose.msra.mxu0 0.0
        %729 = vmatprep.mubr.f32.mxu0 0.0
        %730 = vmatmul.mubr.f32.gmra.mrb[0].mxu0 %v660
        %v731 = vpop.f32.mrb[0].mxu0
        %v732 = vadd.f32 %v656, %v731
        %v733 = vpop.f32.mrb[0].mxu0
        %734 = vdwg.mxu0
        %v735 = vsel %vm658, %v732, -inf
        %736 = vmax.xlane.f32.xlu0 %v735
        %v737 = vpop.xlane.xlu0 %736
        %v738 = vsub.f32 %v732, %v737
        %v739 = vmul.f32 %v738, 1.442695
        %v740 = vpow.pop %v739
        %v741 = vsel %vm658, %v740, 0.0
        %742 = vadd.xlane.f32.xlu0 %v741
        %v743 = vpop.xlane.xlu0 %742
        %v744 = vrcp.pop %v743
        %v745 = vmul.f32 %v740, %v744
        %746 = vrot.lane.b32.xlu0 %v648, 96
        %v747 = vpop.permute.xlu0 %746
        %v750 = vsel %vm658, %v745, 0
        %752 = vmatprep.subr.mxu0 0.0
        %753 = vmatpush1.msra.mxu0 %v747
        %754 = vmatprep.subr.mxu0 0.0
        %755 = vmatpush1.msra.mxu0 0.0
        %756 = vmatprep.subr.mxu0 0.0
        %757 = vmatpush1.msra.mxu0 0.0
        %758 = vmatprep.subr.mxu0 0.0
        %759 = vmatpush1.msra.mxu0 0.0
        %760 = vmatprep.subr.mxu0 0.0
        %761 = vmatpush1.msra.mxu0 0.0
        %762 = vmatprep.subr.mxu0 0.0
        %763 = vmatpush1.msra.mxu0 0.0
        %764 = vmatprep.subr.mxu0 0.0
        %765 = vmatpush1.msra.mxu0 0.0
        %766 = vmatprep.subr.mxu0 0.0
        %767 = vmatpush1.msra.mxu0 0.0
        %768 = vmatprep.subr.mxu0 0.0
        %769 = vmatpush1.msra.mxu0 0.0
        %770 = vmatprep.subr.mxu0 0.0
        %771 = vmatpush1.msra.mxu0 0.0
        %772 = vmatprep.subr.mxu0 0.0
        %773 = vmatpush1.msra.mxu0 0.0
        %774 = vmatprep.subr.mxu0 0.0
        %775 = vmatpush1.msra.mxu0 0.0
        %776 = vmatprep.subr.mxu0 0.0
        %777 = vmatpush1.msra.mxu0 0.0
        %778 = vmatprep.subr.mxu0 0.0
        %779 = vmatpush1.msra.mxu0 0.0
        %780 = vmatprep.subr.mxu0 0.0
        %781 = vmatpush1.msra.mxu0 0.0
        %782 = vmatprep.subr.mxu0 0.0
        %783 = vmatpush1.msra.mxu0 0.0
        %784 = vmatprep.subr.mxu0 0.0
        %785 = vmatpush1.msra.mxu0 0.0
        %786 = vmatprep.subr.mxu0 0.0
        %787 = vmatpush1.msra.mxu0 0.0
        %788 = vmatprep.subr.mxu0 0.0
        %789 = vmatpush1.msra.mxu0 0.0
        %790 = vmatprep.subr.mxu0 0.0
        %791 = vmatpush1.msra.mxu0 0.0
        %792 = vmatprep.subr.mxu0 0.0
        %793 = vmatpush1.msra.mxu0 0.0
        %794 = vmatprep.subr.mxu0 0.0
        %795 = vmatpush1.msra.mxu0 0.0
        %796 = vmatprep.subr.mxu0 0.0
        %797 = vmatpush1.msra.mxu0 0.0
        %798 = vmatprep.subr.mxu0 0.0
        %799 = vmatpush1.msra.mxu0 0.0
        %800 = vmatprep.subr.mxu0 0.0
        %801 = vmatpush1.msra.mxu0 0.0
        %802 = vmatprep.subr.mxu0 0.0
        %803 = vmatpush1.msra.mxu0 0.0
        %804 = vmatprep.subr.mxu0 0.0
        %805 = vmatpush1.msra.mxu0 0.0
        %806 = vmatprep.subr.mxu0 0.0
        %807 = vmatpush1.msra.mxu0 0.0
        %808 = vmatprep.subr.mxu0 0.0
        %809 = vmatpush1.msra.mxu0 0.0
        %810 = vmatprep.subr.mxu0 0.0
        %811 = vmatpush1.msra.mxu0 0.0
        %812 = vmatprep.subr.mxu0 0.0
        %813 = vmatpush1.msra.mxu0 0.0
        %814 = vmatprep.subr.mxu0 0.0
        %815 = vmatpush1.msra.mxu0 0.0
        %816 = vmatprep.mubr.f32.mxu0 0.0
        %817 = vmatmul.mubr.f32.gmra.mrb[0].mxu0 %v750
        %v818 = vpop.f32.mrb[0].mxu0
        %v819 = vadd.f32 0.0, %v818
        %v820 = vpop.f32.mrb[0].mxu0
        %821 = vdwg.mxu0
        %v822 = vld [vmem:[#allocation10] sm:$0xff]
        %823 = vrot.lane.b32.xlu0 %v564, 120
        %v824 = vpop.permute.xlu0 %823
        %825 = vrot.lane.b32.xlu0 %v648, 120
        %v826 = vpop.permute.xlu0 %825
        %v827 = vsel %vm658, %v824, 0
        %v829 = vsel %vm658, %v826, 0
        %831 = vmatprep.subr.mxu0 0.0
        %832 = vmatpush1.xpose.msra.mxu0 %v829
        %833 = vmatprep.subr.mxu0 0.0
        %834 = vmatpush1.xpose.msra.mxu0 0.0
        %835 = vmatprep.subr.mxu0 0.0
        %836 = vmatpush1.xpose.msra.mxu0 0.0
        %837 = vmatprep.subr.mxu0 0.0
        %838 = vmatpush1.xpose.msra.mxu0 0.0
        %839 = vmatprep.subr.mxu0 0.0
        %840 = vmatpush1.xpose.msra.mxu0 0.0
        %841 = vmatprep.subr.mxu0 0.0
        %842 = vmatpush1.xpose.msra.mxu0 0.0
        %843 = vmatprep.subr.mxu0 0.0
        %844 = vmatpush1.xpose.msra.mxu0 0.0
        %845 = vmatprep.subr.mxu0 0.0
        %846 = vmatpush1.xpose.msra.mxu0 0.0
        %847 = vmatprep.subr.mxu0 0.0
        %848 = vmatpush1.xpose.msra.mxu0 0.0
        %849 = vmatprep.subr.mxu0 0.0
        %850 = vmatpush1.xpose.msra.mxu0 0.0
        %851 = vmatprep.subr.mxu0 0.0
        %852 = vmatpush1.xpose.msra.mxu0 0.0
        %853 = vmatprep.subr.mxu0 0.0
        %854 = vmatpush1.xpose.msra.mxu0 0.0
        %855 = vmatprep.subr.mxu0 0.0
        %856 = vmatpush1.xpose.msra.mxu0 0.0
        %857 = vmatprep.subr.mxu0 0.0
        %858 = vmatpush1.xpose.msra.mxu0 0.0
        %859 = vmatprep.subr.mxu0 0.0
        %860 = vmatpush1.xpose.msra.mxu0 0.0
        %861 = vmatprep.subr.mxu0 0.0
        %862 = vmatpush1.xpose.msra.mxu0 0.0
        %863 = vmatprep.subr.mxu0 0.0
        %864 = vmatpush1.xpose.msra.mxu0 0.0
        %865 = vmatprep.subr.mxu0 0.0
        %866 = vmatpush1.xpose.msra.mxu0 0.0
        %867 = vmatprep.subr.mxu0 0.0
        %868 = vmatpush1.xpose.msra.mxu0 0.0
        %869 = vmatprep.subr.mxu0 0.0
        %870 = vmatpush1.xpose.msra.mxu0 0.0
        %871 = vmatprep.subr.mxu0 0.0
        %872 = vmatpush1.xpose.msra.mxu0 0.0
        %873 = vmatprep.subr.mxu0 0.0
        %874 = vmatpush1.xpose.msra.mxu0 0.0
        %875 = vmatprep.subr.mxu0 0.0
        %876 = vmatpush1.xpose.msra.mxu0 0.0
        %877 = vmatprep.subr.mxu0 0.0
        %878 = vmatpush1.xpose.msra.mxu0 0.0
        %879 = vmatprep.subr.mxu0 0.0
        %880 = vmatpush1.xpose.msra.mxu0 0.0
        %881 = vmatprep.subr.mxu0 0.0
        %882 = vmatpush1.xpose.msra.mxu0 0.0
        %883 = vmatprep.subr.mxu0 0.0
        %884 = vmatpush1.xpose.msra.mxu0 0.0
        %885 = vmatprep.subr.mxu0 0.0
        %886 = vmatpush1.xpose.msra.mxu0 0.0
        %887 = vmatprep.subr.mxu0 0.0
        %888 = vmatpush1.xpose.msra.mxu0 0.0
        %889 = vmatprep.subr.mxu0 0.0
        %890 = vmatpush1.xpose.msra.mxu0 0.0
        %891 = vmatprep.subr.mxu0 0.0
        %892 = vmatpush1.xpose.msra.mxu0 0.0
        %893 = vmatprep.subr.mxu0 0.0
        %894 = vmatpush1.xpose.msra.mxu0 0.0
        %895 = vmatprep.mubr.f32.mxu0 0.0
        %896 = vmatmul.mubr.f32.gmra.mrb[0].mxu0 %v827
        %v897 = vpop.f32.mrb[0].mxu0
        %v898 = vadd.f32 %v656, %v897
        %v899 = vpop.f32.mrb[0].mxu0
        %900 = vdwg.mxu0
        %v901 = vsel %vm658, %v898, -inf
        %902 = vmax.xlane.f32.xlu0 %v901
        %v903 = vpop.xlane.xlu0 %902
        %v904 = vsub.f32 %v898, %v903
        %v905 = vmul.f32 %v904, 1.442695
        %v906 = vpow.pop %v905
        %v907 = vsel %vm658, %v906, 0.0
        %908 = vadd.xlane.f32.xlu0 %v907
        %v909 = vpop.xlane.xlu0 %908
        %v910 = vrcp.pop %v909
        %v911 = vmul.f32 %v906, %v910
        %912 = vrot.lane.b32.xlu0 %v648, 88
        %v913 = vpop.permute.xlu0 %912
        %v916 = vsel %vm658, %v911, 0
        %918 = vmatprep.subr.mxu0 0.0
        %919 = vmatpush1.msra.mxu0 %v913
        %920 = vmatprep.subr.mxu0 0.0
        %921 = vmatpush1.msra.mxu0 0.0
        %922 = vmatprep.subr.mxu0 0.0
        %923 = vmatpush1.msra.mxu0 0.0
        %924 = vmatprep.subr.mxu0 0.0
        %925 = vmatpush1.msra.mxu0 0.0
        %926 = vmatprep.subr.mxu0 0.0
        %927 = vmatpush1.msra.mxu0 0.0
        %928 = vmatprep.subr.mxu0 0.0
        %929 = vmatpush1.msra.mxu0 0.0
        %930 = vmatprep.subr.mxu0 0.0
        %931 = vmatpush1.msra.mxu0 0.0
        %932 = vmatprep.subr.mxu0 0.0
        %933 = vmatpush1.msra.mxu0 0.0
        %934 = vmatprep.subr.mxu0 0.0
        %935 = vmatpush1.msra.mxu0 0.0
        %936 = vmatprep.subr.mxu0 0.0
        %937 = vmatpush1.msra.mxu0 0.0
        %938 = vmatprep.subr.mxu0 0.0
        %939 = vmatpush1.msra.mxu0 0.0
        %940 = vmatprep.subr.mxu0 0.0
        %941 = vmatpush1.msra.mxu0 0.0
        %942 = vmatprep.subr.mxu0 0.0
        %943 = vmatpush1.msra.mxu0 0.0
        %944 = vmatprep.subr.mxu0 0.0
        %945 = vmatpush1.msra.mxu0 0.0
        %946 = vmatprep.subr.mxu0 0.0
        %947 = vmatpush1.msra.mxu0 0.0
        %948 = vmatprep.subr.mxu0 0.0
        %949 = vmatpush1.msra.mxu0 0.0
        %950 = vmatprep.subr.mxu0 0.0
        %951 = vmatpush1.msra.mxu0 0.0
        %952 = vmatprep.subr.mxu0 0.0
        %953 = vmatpush1.msra.mxu0 0.0
        %954 = vmatprep.subr.mxu0 0.0
        %955 = vmatpush1.msra.mxu0 0.0
        %956 = vmatprep.subr.mxu0 0.0
        %957 = vmatpush1.msra.mxu0 0.0
        %958 = vmatprep.subr.mxu0 0.0
        %959 = vmatpush1.msra.mxu0 0.0
        %960 = vmatprep.subr.mxu0 0.0
        %961 = vmatpush1.msra.mxu0 0.0
        %962 = vmatprep.subr.mxu0 0.0
        %963 = vmatpush1.msra.mxu0 0.0
        %964 = vmatprep.subr.mxu0 0.0
        %965 = vmatpush1.msra.mxu0 0.0
        %966 = vmatprep.subr.mxu0 0.0
        %967 = vmatpush1.msra.mxu0 0.0
        %968 = vmatprep.subr.mxu0 0.0
        %969 = vmatpush1.msra.mxu0 0.0
        %970 = vmatprep.subr.mxu0 0.0
        %971 = vmatpush1.msra.mxu0 0.0
        %972 = vmatprep.subr.mxu0 0.0
        %973 = vmatpush1.msra.mxu0 0.0
        %974 = vmatprep.subr.mxu0 0.0
        %975 = vmatpush1.msra.mxu0 0.0
        %976 = vmatprep.subr.mxu0 0.0
        %977 = vmatpush1.msra.mxu0 0.0
        %978 = vmatprep.subr.mxu0 0.0
        %979 = vmatpush1.msra.mxu0 0.0
        %980 = vmatprep.subr.mxu0 0.0
        %981 = vmatpush1.msra.mxu0 0.0
        %982 = vmatprep.mubr.f32.mxu0 0.0
        %983 = vmatmul.mubr.f32.gmra.mrb[0].mxu0 %v916
        %v984 = vpop.f32.mrb[0].mxu0
        %v985 = vadd.f32 0.0, %v984
        %v986 = vpop.f32.mrb[0].mxu0
        %987 = vdwg.mxu0
        %v988 = vld [vmem:[#allocation10 + $0x8] sm:$0xff]
        %v990 = vsel %vm658, %v985, 0
        %992 = vmatprep.subr.mxu0 0.0
        %993 = vmatpush1.msra.mxu0 %v988
        %994 = vmatprep.subr.mxu0 0.0
        %995 = vmatpush1.msra.mxu0 0.0
        %996 = vmatprep.subr.mxu0 0.0
        %997 = vmatpush1.msra.mxu0 0.0
        %998 = vmatprep.subr.mxu0 0.0
        %999 = vmatpush1.msra.mxu0 0.0
        %1000 = vmatprep.subr.mxu0 0.0
        %1001 = vmatpush1.msra.mxu0 0.0
        %1002 = vmatprep.subr.mxu0 0.0
        %1003 = vmatpush1.msra.mxu0 0.0
        %1004 = vmatprep.subr.mxu0 0.0
        %1005 = vmatpush1.msra.mxu0 0.0
        %1006 = vmatprep.subr.mxu0 0.0
        %1007 = vmatpush1.msra.mxu0 0.0
        %1008 = vmatprep.subr.mxu0 0.0
        %1009 = vmatpush1.msra.mxu0 0.0
        %1010 = vmatprep.subr.mxu0 0.0
        %1011 = vmatpush1.msra.mxu0 0.0
        %1012 = vmatprep.subr.mxu0 0.0
        %1013 = vmatpush1.msra.mxu0 0.0
        %1014 = vmatprep.subr.mxu0 0.0
        %1015 = vmatpush1.msra.mxu0 0.0
        %1016 = vmatprep.subr.mxu0 0.0
        %1017 = vmatpush1.msra.mxu0 0.0
        %1018 = vmatprep.subr.mxu0 0.0
        %1019 = vmatpush1.msra.mxu0 0.0
        %1020 = vmatprep.subr.mxu0 0.0
        %1021 = vmatpush1.msra.mxu0 0.0
        %1022 = vmatprep.subr.mxu0 0.0
        %1023 = vmatpush1.msra.mxu0 0.0
        %1024 = vmatprep.subr.mxu0 0.0
        %1025 = vmatpush1.msra.mxu0 0.0
        %1026 = vmatprep.subr.mxu0 0.0
        %1027 = vmatpush1.msra.mxu0 0.0
        %1028 = vmatprep.subr.mxu0 0.0
        %1029 = vmatpush1.msra.mxu0 0.0
        %1030 = vmatprep.subr.mxu0 0.0
        %1031 = vmatpush1.msra.mxu0 0.0
        %1032 = vmatprep.subr.mxu0 0.0
        %1033 = vmatpush1.msra.mxu0 0.0
        %1034 = vmatprep.subr.mxu0 0.0
        %1035 = vmatpush1.msra.mxu0 0.0
        %1036 = vmatprep.subr.mxu0 0.0
        %1037 = vmatpush1.msra.mxu0 0.0
        %1038 = vmatprep.subr.mxu0 0.0
        %1039 = vmatpush1.msra.mxu0 0.0
        %1040 = vmatprep.subr.mxu0 0.0
        %1041 = vmatpush1.msra.mxu0 0.0
        %1042 = vmatprep.subr.mxu0 0.0
        %1043 = vmatpush1.msra.mxu0 0.0
        %1044 = vmatprep.subr.mxu0 0.0
        %1045 = vmatpush1.msra.mxu0 0.0
        %1046 = vmatprep.subr.mxu0 0.0
        %1047 = vmatpush1.msra.mxu0 0.0
        %1048 = vmatprep.subr.mxu0 0.0
        %1049 = vmatpush1.msra.mxu0 0.0
        %1050 = vmatprep.subr.mxu0 0.0
        %1051 = vmatpush1.msra.mxu0 0.0
        %1052 = vmatprep.subr.mxu0 0.0
        %1053 = vmatpush1.msra.mxu0 0.0
        %1054 = vmatprep.subr.mxu0 0.0
        %1055 = vmatpush1.msra.mxu0 0.0
        %1056 = vmatprep.mubr.f32.mxu0 0.0
        %1057 = vmatmul.mubr.f32.gmra.mrb[0].mxu0 %v990
        %v1058 = vpop.f32.mrb[0].mxu0
        %v1059 = vadd.f32 0.0, %v1058
        %v1060 = vpop.f32.mrb[0].mxu0
        %1061 = vdwg.mxu0
        %v1063 = vsel %vm658, %v819, 0
        %1065 = vmatprep.subr.mxu0 0.0
        %1066 = vmatpush1.msra.mxu0 %v822
        %1067 = vmatprep.subr.mxu0 0.0
        %1068 = vmatpush1.msra.mxu0 0.0
        %1069 = vmatprep.subr.mxu0 0.0
        %1070 = vmatpush1.msra.mxu0 0.0
        %1071 = vmatprep.subr.mxu0 0.0
        %1072 = vmatpush1.msra.mxu0 0.0
        %1073 = vmatprep.subr.mxu0 0.0
        %1074 = vmatpush1.msra.mxu0 0.0
        %1075 = vmatprep.subr.mxu0 0.0
        %1076 = vmatpush1.msra.mxu0 0.0
        %1077 = vmatprep.subr.mxu0 0.0
        %1078 = vmatpush1.msra.mxu0 0.0
        %1079 = vmatprep.subr.mxu0 0.0
        %1080 = vmatpush1.msra.mxu0 0.0
        %1081 = vmatprep.subr.mxu0 0.0
        %1082 = vmatpush1.msra.mxu0 0.0
        %1083 = vmatprep.subr.mxu0 0.0
        %1084 = vmatpush1.msra.mxu0 0.0
        %1085 = vmatprep.subr.mxu0 0.0
        %1086 = vmatpush1.msra.mxu0 0.0
        %1087 = vmatprep.subr.mxu0 0.0
        %1088 = vmatpush1.msra.mxu0 0.0
        %1089 = vmatprep.subr.mxu0 0.0
        %1090 = vmatpush1.msra.mxu0 0.0
        %1091 = vmatprep.subr.mxu0 0.0
        %1092 = vmatpush1.msra.mxu0 0.0
        %1093 = vmatprep.subr.mxu0 0.0
        %1094 = vmatpush1.msra.mxu0 0.0
        %1095 = vmatprep.subr.mxu0 0.0
        %1096 = vmatpush1.msra.mxu0 0.0
        %1097 = vmatprep.subr.mxu0 0.0
        %1098 = vmatpush1.msra.mxu0 0.0
        %1099 = vmatprep.subr.mxu0 0.0
        %1100 = vmatpush1.msra.mxu0 0.0
        %1101 = vmatprep.subr.mxu0 0.0
        %1102 = vmatpush1.msra.mxu0 0.0
        %1103 = vmatprep.subr.mxu0 0.0
        %1104 = vmatpush1.msra.mxu0 0.0
        %1105 = vmatprep.subr.mxu0 0.0
        %1106 = vmatpush1.msra.mxu0 0.0
        %1107 = vmatprep.subr.mxu0 0.0
        %1108 = vmatpush1.msra.mxu0 0.0
        %1109 = vmatprep.subr.mxu0 0.0
        %1110 = vmatpush1.msra.mxu0 0.0
        %1111 = vmatprep.subr.mxu0 0.0
        %1112 = vmatpush1.msra.mxu0 0.0
        %1113 = vmatprep.subr.mxu0 0.0
        %1114 = vmatpush1.msra.mxu0 0.0
        %1115 = vmatprep.subr.mxu0 0.0
        %1116 = vmatpush1.msra.mxu0 0.0
        %1117 = vmatprep.subr.mxu0 0.0
        %1118 = vmatpush1.msra.mxu0 0.0
        %1119 = vmatprep.subr.mxu0 0.0
        %1120 = vmatpush1.msra.mxu0 0.0
        %1121 = vmatprep.subr.mxu0 0.0
        %1122 = vmatpush1.msra.mxu0 0.0
        %1123 = vmatprep.subr.mxu0 0.0
        %1124 = vmatpush1.msra.mxu0 0.0
        %1125 = vmatprep.subr.mxu0 0.0
        %1126 = vmatpush1.msra.mxu0 0.0
        %1127 = vmatprep.subr.mxu0 0.0
        %1128 = vmatpush1.msra.mxu0 0.0
        %1129 = vmatprep.mubr.f32.mxu0 0.0
        %1130 = vmatmul.mubr.f32.gmra.mrb[0].mxu0 %v1063
        %v1131 = vpop.f32.mrb[0].mxu0
        %v1132 = vadd.f32 %v1059, %v1131
        %v1133 = vpop.f32.mrb[0].mxu0
        %1134 = vdwg.mxu0
        %v1135 = vadd.f32 %v745, %v911
        %1136 = vrot.lane.b32.xlu0 %v564, 112
        %v1137 = vpop.permute.xlu0 %1136
        %1138 = vrot.lane.b32.xlu0 %v648, 112
        %v1139 = vpop.permute.xlu0 %1138
        %v1140 = vsel %vm658, %v1137, 0
        %v1142 = vsel %vm658, %v1139, 0
        %1144 = vmatprep.subr.mxu0 0.0
        %1145 = vmatpush1.xpose.msra.mxu0 %v1142
        %1146 = vmatprep.subr.mxu0 0.0
        %1147 = vmatpush1.xpose.msra.mxu0 0.0
        %1148 = vmatprep.subr.mxu0 0.0
        %1149 = vmatpush1.xpose.msra.mxu0 0.0
        %1150 = vmatprep.subr.mxu0 0.0
        %1151 = vmatpush1.xpose.msra.mxu0 0.0
        %1152 = vmatprep.subr.mxu0 0.0
        %1153 = vmatpush1.xpose.msra.mxu0 0.0
        %1154 = vmatprep.subr.mxu0 0.0
        %1155 = vmatpush1.xpose.msra.mxu0 0.0
        %1156 = vmatprep.subr.mxu0 0.0
        %1157 = vmatpush1.xpose.msra.mxu0 0.0
        %1158 = vmatprep.subr.mxu0 0.0
        %1159 = vmatpush1.xpose.msra.mxu0 0.0
        %1160 = vmatprep.subr.mxu0 0.0
        %1161 = vmatpush1.xpose.msra.mxu0 0.0
        %1162 = vmatprep.subr.mxu0 0.0
        %1163 = vmatpush1.xpose.msra.mxu0 0.0
        %1164 = vmatprep.subr.mxu0 0.0
        %1165 = vmatpush1.xpose.msra.mxu0 0.0
        %1166 = vmatprep.subr.mxu0 0.0
        %1167 = vmatpush1.xpose.msra.mxu0 0.0
        %1168 = vmatprep.subr.mxu0 0.0
        %1169 = vmatpush1.xpose.msra.mxu0 0.0
        %1170 = vmatprep.subr.mxu0 0.0
        %1171 = vmatpush1.xpose.msra.mxu0 0.0
        %1172 = vmatprep.subr.mxu0 0.0
        %1173 = vmatpush1.xpose.msra.mxu0 0.0
        %1174 = vmatprep.subr.mxu0 0.0
        %1175 = vmatpush1.xpose.msra.mxu0 0.0
        %1176 = vmatprep.subr.mxu0 0.0
        %1177 = vmatpush1.xpose.msra.mxu0 0.0
        %1178 = vmatprep.subr.mxu0 0.0
        %1179 = vmatpush1.xpose.msra.mxu0 0.0
        %1180 = vmatprep.subr.mxu0 0.0
        %1181 = vmatpush1.xpose.msra.mxu0 0.0
        %1182 = vmatprep.subr.mxu0 0.0
        %1183 = vmatpush1.xpose.msra.mxu0 0.0
        %1184 = vmatprep.subr.mxu0 0.0
        %1185 = vmatpush1.xpose.msra.mxu0 0.0
        %1186 = vmatprep.subr.mxu0 0.0
        %1187 = vmatpush1.xpose.msra.mxu0 0.0
        %1188 = vmatprep.subr.mxu0 0.0
        %1189 = vmatpush1.xpose.msra.mxu0 0.0
        %1190 = vmatprep.subr.mxu0 0.0
        %1191 = vmatpush1.xpose.msra.mxu0 0.0
        %1192 = vmatprep.subr.mxu0 0.0
        %1193 = vmatpush1.xpose.msra.mxu0 0.0
        %1194 = vmatprep.subr.mxu0 0.0
        %1195 = vmatpush1.xpose.msra.mxu0 0.0
        %1196 = vmatprep.subr.mxu0 0.0
        %1197 = vmatpush1.xpose.msra.mxu0 0.0
        %1198 = vmatprep.subr.mxu0 0.0
        %1199 = vmatpush1.xpose.msra.mxu0 0.0
        %1200 = vmatprep.subr.mxu0 0.0
        %1201 = vmatpush1.xpose.msra.mxu0 0.0
        %1202 = vmatprep.subr.mxu0 0.0
        %1203 = vmatpush1.xpose.msra.mxu0 0.0
        %1204 = vmatprep.subr.mxu0 0.0
        %1205 = vmatpush1.xpose.msra.mxu0 0.0
        %1206 = vmatprep.subr.mxu0 0.0
        %1207 = vmatpush1.xpose.msra.mxu0 0.0
        %1208 = vmatprep.mubr.f32.mxu0 0.0
        %1209 = vmatmul.mubr.f32.gmra.mrb[0].mxu0 %v1140
        %v1210 = vpop.f32.mrb[0].mxu0
        %v1211 = vadd.f32 %v656, %v1210
        %v1212 = vpop.f32.mrb[0].mxu0
        %1213 = vdwg.mxu0
        %v1214 = vsel %vm658, %v1211, -inf
        %1215 = vmax.xlane.f32.xlu0 %v1214
        %v1216 = vpop.xlane.xlu0 %1215
        %v1217 = vsub.f32 %v1211, %v1216
        %v1218 = vmul.f32 %v1217, 1.442695
        %v1219 = vpow.pop %v1218
        %v1220 = vsel %vm658, %v1219, 0.0
        %1221 = vadd.xlane.f32.xlu0 %v1220
        %v1222 = vpop.xlane.xlu0 %1221
        %v1223 = vrcp.pop %v1222
        %v1224 = vmul.f32 %v1219, %v1223
        %1225 = vrot.lane.b32.xlu0 %v648, 80
        %v1226 = vpop.permute.xlu0 %1225
        %v1229 = vsel %vm658, %v1224, 0
        %1231 = vmatprep.subr.mxu0 0.0
        %1232 = vmatpush1.msra.mxu0 %v1226
        %1233 = vmatprep.subr.mxu0 0.0
        %1234 = vmatpush1.msra.mxu0 0.0
        %1235 = vmatprep.subr.mxu0 0.0
        %1236 = vmatpush1.msra.mxu0 0.0
        %1237 = vmatprep.subr.mxu0 0.0
        %1238 = vmatpush1.msra.mxu0 0.0
        %1239 = vmatprep.subr.mxu0 0.0
        %1240 = vmatpush1.msra.mxu0 0.0
        %1241 = vmatprep.subr.mxu0 0.0
        %1242 = vmatpush1.msra.mxu0 0.0
        %1243 = vmatprep.subr.mxu0 0.0
        %1244 = vmatpush1.msra.mxu0 0.0
        %1245 = vmatprep.subr.mxu0 0.0
        %1246 = vmatpush1.msra.mxu0 0.0
        %1247 = vmatprep.subr.mxu0 0.0
        %1248 = vmatpush1.msra.mxu0 0.0
        %1249 = vmatprep.subr.mxu0 0.0
        %1250 = vmatpush1.msra.mxu0 0.0
        %1251 = vmatprep.subr.mxu0 0.0
        %1252 = vmatpush1.msra.mxu0 0.0
        %1253 = vmatprep.subr.mxu0 0.0
        %1254 = vmatpush1.msra.mxu0 0.0
        %1255 = vmatprep.subr.mxu0 0.0
        %1256 = vmatpush1.msra.mxu0 0.0
        %1257 = vmatprep.subr.mxu0 0.0
        %1258 = vmatpush1.msra.mxu0 0.0
        %1259 = vmatprep.subr.mxu0 0.0
        %1260 = vmatpush1.msra.mxu0 0.0
        %1261 = vmatprep.subr.mxu0 0.0
        %1262 = vmatpush1.msra.mxu0 0.0
        %1263 = vmatprep.subr.mxu0 0.0
        %1264 = vmatpush1.msra.mxu0 0.0
        %1265 = vmatprep.subr.mxu0 0.0
        %1266 = vmatpush1.msra.mxu0 0.0
        %1267 = vmatprep.subr.mxu0 0.0
        %1268 = vmatpush1.msra.mxu0 0.0
        %1269 = vmatprep.subr.mxu0 0.0
        %1270 = vmatpush1.msra.mxu0 0.0
        %1271 = vmatprep.subr.mxu0 0.0
        %1272 = vmatpush1.msra.mxu0 0.0
        %1273 = vmatprep.subr.mxu0 0.0
        %1274 = vmatpush1.msra.mxu0 0.0
        %1275 = vmatprep.subr.mxu0 0.0
        %1276 = vmatpush1.msra.mxu0 0.0
        %1277 = vmatprep.subr.mxu0 0.0
        %1278 = vmatpush1.msra.mxu0 0.0
        %1279 = vmatprep.subr.mxu0 0.0
        %1280 = vmatpush1.msra.mxu0 0.0
        %1281 = vmatprep.subr.mxu0 0.0
        %1282 = vmatpush1.msra.mxu0 0.0
        %1283 = vmatprep.subr.mxu0 0.0
        %1284 = vmatpush1.msra.mxu0 0.0
        %1285 = vmatprep.subr.mxu0 0.0
        %1286 = vmatpush1.msra.mxu0 0.0
        %1287 = vmatprep.subr.mxu0 0.0
        %1288 = vmatpush1.msra.mxu0 0.0
        %1289 = vmatprep.subr.mxu0 0.0
        %1290 = vmatpush1.msra.mxu0 0.0
        %1291 = vmatprep.subr.mxu0 0.0
        %1292 = vmatpush1.msra.mxu0 0.0
        %1293 = vmatprep.subr.mxu0 0.0
        %1294 = vmatpush1.msra.mxu0 0.0
        %1295 = vmatprep.mubr.f32.mxu0 0.0
        %1296 = vmatmul.mubr.f32.gmra.mrb[0].mxu0 %v1229
        %v1297 = vpop.f32.mrb[0].mxu0
        %v1298 = vadd.f32 0.0, %v1297
        %v1299 = vpop.f32.mrb[0].mxu0
        %1300 = vdwg.mxu0
        %v1301 = vld [vmem:[#allocation10 + $0x10] sm:$0xff]
        %v1303 = vsel %vm658, %v1298, 0
        %1305 = vmatprep.subr.mxu0 0.0
        %1306 = vmatpush1.msra.mxu0 %v1301
        %1307 = vmatprep.subr.mxu0 0.0
        %1308 = vmatpush1.msra.mxu0 0.0
        %1309 = vmatprep.subr.mxu0 0.0
        %1310 = vmatpush1.msra.mxu0 0.0
        %1311 = vmatprep.subr.mxu0 0.0
        %1312 = vmatpush1.msra.mxu0 0.0
        %1313 = vmatprep.subr.mxu0 0.0
        %1314 = vmatpush1.msra.mxu0 0.0
        %1315 = vmatprep.subr.mxu0 0.0
        %1316 = vmatpush1.msra.mxu0 0.0
        %1317 = vmatprep.subr.mxu0 0.0
        %1318 = vmatpush1.msra.mxu0 0.0
        %1319 = vmatprep.subr.mxu0 0.0
        %1320 = vmatpush1.msra.mxu0 0.0
        %1321 = vmatprep.subr.mxu0 0.0
        %1322 = vmatpush1.msra.mxu0 0.0
        %1323 = vmatprep.subr.mxu0 0.0
        %1324 = vmatpush1.msra.mxu0 0.0
        %1325 = vmatprep.subr.mxu0 0.0
        %1326 = vmatpush1.msra.mxu0 0.0
        %1327 = vmatprep.subr.mxu0 0.0
        %1328 = vmatpush1.msra.mxu0 0.0
        %1329 = vmatprep.subr.mxu0 0.0
        %1330 = vmatpush1.msra.mxu0 0.0
        %1331 = vmatprep.subr.mxu0 0.0
        %1332 = vmatpush1.msra.mxu0 0.0
        %1333 = vmatprep.subr.mxu0 0.0
        %1334 = vmatpush1.msra.mxu0 0.0
        %1335 = vmatprep.subr.mxu0 0.0
        %1336 = vmatpush1.msra.mxu0 0.0
        %1337 = vmatprep.subr.mxu0 0.0
        %1338 = vmatpush1.msra.mxu0 0.0
        %1339 = vmatprep.subr.mxu0 0.0
        %1340 = vmatpush1.msra.mxu0 0.0
        %1341 = vmatprep.subr.mxu0 0.0
        %1342 = vmatpush1.msra.mxu0 0.0
        %1343 = vmatprep.subr.mxu0 0.0
        %1344 = vmatpush1.msra.mxu0 0.0
        %1345 = vmatprep.subr.mxu0 0.0
        %1346 = vmatpush1.msra.mxu0 0.0
        %1347 = vmatprep.subr.mxu0 0.0
        %1348 = vmatpush1.msra.mxu0 0.0
        %1349 = vmatprep.subr.mxu0 0.0
        %1350 = vmatpush1.msra.mxu0 0.0
        %1351 = vmatprep.subr.mxu0 0.0
        %1352 = vmatpush1.msra.mxu0 0.0
        %1353 = vmatprep.subr.mxu0 0.0
        %1354 = vmatpush1.msra.mxu0 0.0
        %1355 = vmatprep.subr.mxu0 0.0
        %1356 = vmatpush1.msra.mxu0 0.0
        %1357 = vmatprep.subr.mxu0 0.0
        %1358 = vmatpush1.msra.mxu0 0.0
        %1359 = vmatprep.subr.mxu0 0.0
        %1360 = vmatpush1.msra.mxu0 0.0
        %1361 = vmatprep.subr.mxu0 0.0
        %1362 = vmatpush1.msra.mxu0 0.0
        %1363 = vmatprep.subr.mxu0 0.0
        %1364 = vmatpush1.msra.mxu0 0.0
        %1365 = vmatprep.subr.mxu0 0.0
        %1366 = vmatpush1.msra.mxu0 0.0
        %1367 = vmatprep.subr.mxu0 0.0
        %1368 = vmatpush1.msra.mxu0 0.0
        %1369 = vmatprep.mubr.f32.mxu0 0.0
        %1370 = vmatmul.mubr.f32.gmra.mrb[0].mxu0 %v1303
        %v1371 = vpop.f32.mrb[0].mxu0
        %v1372 = vadd.f32 0.0, %v1371
        %v1373 = vpop.f32.mrb[0].mxu0
        %1374 = vdwg.mxu0
        %v1375 = vadd.f32 %v1132, %v1372
        %v1376 = vadd.f32 %v1135, %v1224
        %1377 = vrot.lane.b32.xlu0 %v564, 104
        %v1378 = vpop.permute.xlu0 %1377
        %1379 = vrot.lane.b32.xlu0 %v648, 104
        %v1380 = vpop.permute.xlu0 %1379
        %v1381 = vsel %vm658, %v1378, 0
        %v1383 = vsel %vm658, %v1380, 0
        %1385 = vmatprep.subr.mxu0 0.0
        %1386 = vmatpush1.xpose.msra.mxu0 %v1383
        %1387 = vmatprep.subr.mxu0 0.0
        %1388 = vmatpush1.xpose.msra.mxu0 0.0
        %1389 = vmatprep.subr.mxu0 0.0
        %1390 = vmatpush1.xpose.msra.mxu0 0.0
        %1391 = vmatprep.subr.mxu0 0.0
        %1392 = vmatpush1.xpose.msra.mxu0 0.0
        %1393 = vmatprep.subr.mxu0 0.0
        %1394 = vmatpush1.xpose.msra.mxu0 0.0
        %1395 = vmatprep.subr.mxu0 0.0
        %1396 = vmatpush1.xpose.msra.mxu0 0.0
        %1397 = vmatprep.subr.mxu0 0.0
        %1398 = vmatpush1.xpose.msra.mxu0 0.0
        %1399 = vmatprep.subr.mxu0 0.0
        %1400 = vmatpush1.xpose.msra.mxu0 0.0
        %1401 = vmatprep.subr.mxu0 0.0
        %1402 = vmatpush1.xpose.msra.mxu0 0.0
        %1403 = vmatprep.subr.mxu0 0.0
        %1404 = vmatpush1.xpose.msra.mxu0 0.0
        %1405 = vmatprep.subr.mxu0 0.0
        %1406 = vmatpush1.xpose.msra.mxu0 0.0
        %1407 = vmatprep.subr.mxu0 0.0
        %1408 = vmatpush1.xpose.msra.mxu0 0.0
        %1409 = vmatprep.subr.mxu0 0.0
        %1410 = vmatpush1.xpose.msra.mxu0 0.0
        %1411 = vmatprep.subr.mxu0 0.0
        %1412 = vmatpush1.xpose.msra.mxu0 0.0
        %1413 = vmatprep.subr.mxu0 0.0
        %1414 = vmatpush1.xpose.msra.mxu0 0.0
        %1415 = vmatprep.subr.mxu0 0.0
        %1416 = vmatpush1.xpose.msra.mxu0 0.0
        %1417 = vmatprep.subr.mxu0 0.0
        %1418 = vmatpush1.xpose.msra.mxu0 0.0
        %1419 = vmatprep.subr.mxu0 0.0
        %1420 = vmatpush1.xpose.msra.mxu0 0.0
        %1421 = vmatprep.subr.mxu0 0.0
        %1422 = vmatpush1.xpose.msra.mxu0 0.0
        %1423 = vmatprep.subr.mxu0 0.0
        %1424 = vmatpush1.xpose.msra.mxu0 0.0
        %1425 = vmatprep.subr.mxu0 0.0
        %1426 = vmatpush1.xpose.msra.mxu0 0.0
        %1427 = vmatprep.subr.mxu0 0.0
        %1428 = vmatpush1.xpose.msra.mxu0 0.0
        %1429 = vmatprep.subr.mxu0 0.0
        %1430 = vmatpush1.xpose.msra.mxu0 0.0
        %1431 = vmatprep.subr.mxu0 0.0
        %1432 = vmatpush1.xpose.msra.mxu0 0.0
        %1433 = vmatprep.subr.mxu0 0.0
        %1434 = vmatpush1.xpose.msra.mxu0 0.0
        %1435 = vmatprep.subr.mxu0 0.0
        %1436 = vmatpush1.xpose.msra.mxu0 0.0
        %1437 = vmatprep.subr.mxu0 0.0
        %1438 = vmatpush1.xpose.msra.mxu0 0.0
        %1439 = vmatprep.subr.mxu0 0.0
        %1440 = vmatpush1.xpose.msra.mxu0 0.0
        %1441 = vmatprep.subr.mxu0 0.0
        %1442 = vmatpush1.xpose.msra.mxu0 0.0
        %1443 = vmatprep.subr.mxu0 0.0
        %1444 = vmatpush1.xpose.msra.mxu0 0.0
        %1445 = vmatprep.subr.mxu0 0.0
        %1446 = vmatpush1.xpose.msra.mxu0 0.0
        %1447 = vmatprep.subr.mxu0 0.0
        %1448 = vmatpush1.xpose.msra.mxu0 0.0
        %1449 = vmatprep.mubr.f32.mxu0 0.0
        %1450 = vmatmul.mubr.f32.gmra.mrb[0].mxu0 %v1381
        %v1451 = vpop.f32.mrb[0].mxu0
        %v1452 = vadd.f32 %v656, %v1451
        %v1453 = vpop.f32.mrb[0].mxu0
        %1454 = vdwg.mxu0
        %v1455 = vsel %vm658, %v1452, -inf
        %1456 = vmax.xlane.f32.xlu0 %v1455
        %v1457 = vpop.xlane.xlu0 %1456
        %v1458 = vsub.f32 %v1452, %v1457
        %v1459 = vmul.f32 %v1458, 1.442695
        %v1460 = vpow.pop %v1459
        %v1461 = vsel %vm658, %v1460, 0.0
        %1462 = vadd.xlane.f32.xlu0 %v1461
        %v1463 = vpop.xlane.xlu0 %1462
        %v1464 = vrcp.pop %v1463
        %v1465 = vmul.f32 %v1460, %v1464
        %1466 = vrot.lane.b32.xlu0 %v648, 72
        %v1467 = vpop.permute.xlu0 %1466
        %v1470 = vsel %vm658, %v1465, 0
        %1472 = vmatprep.subr.mxu0 0.0
        %1473 = vmatpush1.msra.mxu0 %v1467
        %1474 = vmatprep.subr.mxu0 0.0
        %1475 = vmatpush1.msra.mxu0 0.0
        %1476 = vmatprep.subr.mxu0 0.0
        %1477 = vmatpush1.msra.mxu0 0.0
        %1478 = vmatprep.subr.mxu0 0.0
        %1479 = vmatpush1.msra.mxu0 0.0
        %1480 = vmatprep.subr.mxu0 0.0
        %1481 = vmatpush1.msra.mxu0 0.0
        %1482 = vmatprep.subr.mxu0 0.0
        %1483 = vmatpush1.msra.mxu0 0.0
        %1484 = vmatprep.subr.mxu0 0.0
        %1485 = vmatpush1.msra.mxu0 0.0
        %1486 = vmatprep.subr.mxu0 0.0
        %1487 = vmatpush1.msra.mxu0 0.0
        %1488 = vmatprep.subr.mxu0 0.0
        %1489 = vmatpush1.msra.mxu0 0.0
        %1490 = vmatprep.subr.mxu0 0.0
        %1491 = vmatpush1.msra.mxu0 0.0
        %1492 = vmatprep.subr.mxu0 0.0
        %1493 = vmatpush1.msra.mxu0 0.0
        %1494 = vmatprep.subr.mxu0 0.0
        %1495 = vmatpush1.msra.mxu0 0.0
        %1496 = vmatprep.subr.mxu0 0.0
        %1497 = vmatpush1.msra.mxu0 0.0
        %1498 = vmatprep.subr.mxu0 0.0
        %1499 = vmatpush1.msra.mxu0 0.0
        %1500 = vmatprep.subr.mxu0 0.0
        %1501 = vmatpush1.msra.mxu0 0.0
        %1502 = vmatprep.subr.mxu0 0.0
        %1503 = vmatpush1.msra.mxu0 0.0
        %1504 = vmatprep.subr.mxu0 0.0
        %1505 = vmatpush1.msra.mxu0 0.0
        %1506 = vmatprep.subr.mxu0 0.0
        %1507 = vmatpush1.msra.mxu0 0.0
        %1508 = vmatprep.subr.mxu0 0.0
        %1509 = vmatpush1.msra.mxu0 0.0
        %1510 = vmatprep.subr.mxu0 0.0
        %1511 = vmatpush1.msra.mxu0 0.0
        %1512 = vmatprep.subr.mxu0 0.0
        %1513 = vmatpush1.msra.mxu0 0.0
        %1514 = vmatprep.subr.mxu0 0.0
        %1515 = vmatpush1.msra.mxu0 0.0
        %1516 = vmatprep.subr.mxu0 0.0
        %1517 = vmatpush1.msra.mxu0 0.0
        %1518 = vmatprep.subr.mxu0 0.0
        %1519 = vmatpush1.msra.mxu0 0.0
        %1520 = vmatprep.subr.mxu0 0.0
        %1521 = vmatpush1.msra.mxu0 0.0
        %1522 = vmatprep.subr.mxu0 0.0
        %1523 = vmatpush1.msra.mxu0 0.0
        %1524 = vmatprep.subr.mxu0 0.0
        %1525 = vmatpush1.msra.mxu0 0.0
        %1526 = vmatprep.subr.mxu0 0.0
        %1527 = vmatpush1.msra.mxu0 0.0
        %1528 = vmatprep.subr.mxu0 0.0
        %1529 = vmatpush1.msra.mxu0 0.0
        %1530 = vmatprep.subr.mxu0 0.0
        %1531 = vmatpush1.msra.mxu0 0.0
        %1532 = vmatprep.subr.mxu0 0.0
        %1533 = vmatpush1.msra.mxu0 0.0
        %1534 = vmatprep.subr.mxu0 0.0
        %1535 = vmatpush1.msra.mxu0 0.0
        %1536 = vmatprep.mubr.f32.mxu0 0.0
        %1537 = vmatmul.mubr.f32.gmra.mrb[0].mxu0 %v1470
        %v1538 = vpop.f32.mrb[0].mxu0
        %v1539 = vadd.f32 0.0, %v1538
        %v1540 = vpop.f32.mrb[0].mxu0
        %1541 = vdwg.mxu0
        %v1542 = vld [vmem:[#allocation10 + $0x18] sm:$0xff]
        %v1544 = vsel %vm658, %v1539, 0
        %1546 = vmatprep.subr.mxu0 0.0
        %1547 = vmatpush1.msra.mxu0 %v1542
        %1548 = vmatprep.subr.mxu0 0.0
        %1549 = vmatpush1.msra.mxu0 0.0
        %1550 = vmatprep.subr.mxu0 0.0
        %1551 = vmatpush1.msra.mxu0 0.0
        %1552 = vmatprep.subr.mxu0 0.0
        %1553 = vmatpush1.msra.mxu0 0.0
        %1554 = vmatprep.subr.mxu0 0.0
        %1555 = vmatpush1.msra.mxu0 0.0
        %1556 = vmatprep.subr.mxu0 0.0
        %1557 = vmatpush1.msra.mxu0 0.0
        %1558 = vmatprep.subr.mxu0 0.0
        %1559 = vmatpush1.msra.mxu0 0.0
        %1560 = vmatprep.subr.mxu0 0.0
        %1561 = vmatpush1.msra.mxu0 0.0
        %1562 = vmatprep.subr.mxu0 0.0
        %1563 = vmatpush1.msra.mxu0 0.0
        %1564 = vmatprep.subr.mxu0 0.0
        %1565 = vmatpush1.msra.mxu0 0.0
        %1566 = vmatprep.subr.mxu0 0.0
        %1567 = vmatpush1.msra.mxu0 0.0
        %1568 = vmatprep.subr.mxu0 0.0
        %1569 = vmatpush1.msra.mxu0 0.0
        %1570 = vmatprep.subr.mxu0 0.0
        %1571 = vmatpush1.msra.mxu0 0.0
        %1572 = vmatprep.subr.mxu0 0.0
        %1573 = vmatpush1.msra.mxu0 0.0
        %1574 = vmatprep.subr.mxu0 0.0
        %1575 = vmatpush1.msra.mxu0 0.0
        %1576 = vmatprep.subr.mxu0 0.0
        %1577 = vmatpush1.msra.mxu0 0.0
        %1578 = vmatprep.subr.mxu0 0.0
        %1579 = vmatpush1.msra.mxu0 0.0
        %1580 = vmatprep.subr.mxu0 0.0
        %1581 = vmatpush1.msra.mxu0 0.0
        %1582 = vmatprep.subr.mxu0 0.0
        %1583 = vmatpush1.msra.mxu0 0.0
        %1584 = vmatprep.subr.mxu0 0.0
        %1585 = vmatpush1.msra.mxu0 0.0
        %1586 = vmatprep.subr.mxu0 0.0
        %1587 = vmatpush1.msra.mxu0 0.0
        %1588 = vmatprep.subr.mxu0 0.0
        %1589 = vmatpush1.msra.mxu0 0.0
        %1590 = vmatprep.subr.mxu0 0.0
        %1591 = vmatpush1.msra.mxu0 0.0
        %1592 = vmatprep.subr.mxu0 0.0
        %1593 = vmatpush1.msra.mxu0 0.0
        %1594 = vmatprep.subr.mxu0 0.0
        %1595 = vmatpush1.msra.mxu0 0.0
        %1596 = vmatprep.subr.mxu0 0.0
        %1597 = vmatpush1.msra.mxu0 0.0
        %1598 = vmatprep.subr.mxu0 0.0
        %1599 = vmatpush1.msra.mxu0 0.0
        %1600 = vmatprep.subr.mxu0 0.0
        %1601 = vmatpush1.msra.mxu0 0.0
        %1602 = vmatprep.subr.mxu0 0.0
        %1603 = vmatpush1.msra.mxu0 0.0
        %1604 = vmatprep.subr.mxu0 0.0
        %1605 = vmatpush1.msra.mxu0 0.0
        %1606 = vmatprep.subr.mxu0 0.0
        %1607 = vmatpush1.msra.mxu0 0.0
        %1608 = vmatprep.subr.mxu0 0.0
        %1609 = vmatpush1.msra.mxu0 0.0
        %1610 = vmatprep.mubr.f32.mxu0 0.0
        %1611 = vmatmul.mubr.f32.gmra.mrb[0].mxu0 %v1544
        %v1612 = vpop.f32.mrb[0].mxu0
        %v1613 = vadd.f32 0.0, %v1612
        %v1614 = vpop.f32.mrb[0].mxu0
        %1615 = vdwg.mxu0
        %v1616 = vadd.f32 %v1375, %v1613
        %v1617 = vadd.f32 %v1376, %v1465
        %v1618 = vld [vmem:[%s8] sm:$0x1]
        %v1620 = vlaneseq
        %v1621 = vshrl.u32 %v1620, 7
        %v1622 = vsub.s32 0, %v1621
        %v1623 = vrot.slane %v1618, %v1622
        %v1625 = vadd.f32 %v1616, %v1623
        %1626 = vst.msk [vmem:[%s469] sm:$0xff] %vm493, %v1625
        %v1627 = vmul.f32 %v1617, 0.25
        %1628 = vst.msk [vmem:[%s476] sm:$0xff] %vm658, %v1627
        %s1629 = sand.u32 %s247, 1
        %s1630 = scalar_lea.sflag [#allocation4], %s1629
        %s1631 = sand.u32 %s247, 1
        %s1632 = smul.addr %s1631, 8
        %s1633 = scalar_lea.vmem [#allocation11], %s1632
        %s1634 = sand.u32 %s273, 1
        %s1635 = scalar_lea.sflag [#allocation13], %s1634
        %s1636 = sand.u32 %s273, 1
        %s1637 = smul.addr %s1636, 8
        %s1638 = scalar_lea.vmem [#allocation12], %s1637
        // Predicated region
        $region77: #{tpu_custom_call.1} parent=55 // pred_check
          %p1639 = pneg %p257
        $region78: #{tpu_custom_call.1} parent=55 // pred_check_branch
          %1641 = sbr.rel (%p1639) target = $region80
        $region79: #{tpu_custom_call.1} parent=55 // pred_region
          %s1643 = ssub.s32 128, 128
          %1644 = vsyncadd %s1630, %s1643
          %s1645 = smul.addr %s35, 128
          %s1646 = scalar_lea.hbm %s9, %s1645
          %s1648 = sshll.u32 %s1633, 4
          %s1649 = int_to_ptr.vmem [resolvable:$true] %s1648
          %1651 = dma.vmem_to_hbm [thread:$0]  %s1649, 128, %s1646, %s1630
        $region80: #{tpu_custom_call.1} parent=55 // pred_fallthru
          _
        // Predicated region
        $region81: #{tpu_custom_call.1} parent=55 // pred_check
          %p1652 = pneg %p283
        $region82: #{tpu_custom_call.1} parent=55 // pred_check_branch
          %1654 = sbr.rel (%p1652) target = $region84
        $region83: #{tpu_custom_call.1} parent=55 // pred_region
          %s1656 = ssub.s32 128, 128
          %1657 = vsyncadd %s1635, %s1656
          %s1658 = smul.addr %s35, 128
          %s1659 = scalar_lea.hbm %s10, %s1658
          %s1661 = sshll.u32 %s1638, 4
          %s1662 = int_to_ptr.vmem [resolvable:$true] %s1661
          %1664 = dma.vmem_to_hbm [thread:$0]  %s1662, 128, %s1659, %s1635
        $region84: #{tpu_custom_call.1} parent=55 // pred_fallthru
          _
      $region56: #{tpu_custom_call.1} parent=5 // pred_fallthru
        _
      %p1665 = scmp.le.s32.totalorder 2, %s30
      // Predicated region
      $region85: #{tpu_custom_call.1} parent=5 // pred_check
        %p1666 = pneg %p1665
      $region86: #{tpu_custom_call.1} parent=5 // pred_check_branch
        %1668 = sbr.rel (%p1666) target = $region88
      $region87: #{tpu_custom_call.1} parent=5 // pred_region
        %s1669 = ssub.s32 %s30, 2
        // Predicated region
        $region89: #{tpu_custom_call.1} parent=87 // pred_check
          %p1670 = pneg %p263
        $region90: #{tpu_custom_call.1} parent=87 // pred_check_branch
          %1672 = sbr.rel (%p1670) target = $region92
        $region91: #{tpu_custom_call.1} parent=87 // pred_region
          %s1673 = sand.u32 %s248, 1
          %s1674 = scalar_lea.sflag [#allocation4], %s1673
          %s1675 = sand.u32 %s248, 1
          %s1676 = smul.addr %s1675, 8
          %s1677 = scalar_lea.vmem [#allocation11], %s1676
          %1678 = dma.done %s1674, 128
        $region92: #{tpu_custom_call.1} parent=87 // pred_fallthru
          _
        // Predicated region
        $region93: #{tpu_custom_call.1} parent=87 // pred_check
          %p1679 = pneg %p289
        $region94: #{tpu_custom_call.1} parent=87 // pred_check_branch
          %1681 = sbr.rel (%p1679) target = $region96
        $region95: #{tpu_custom_call.1} parent=87 // pred_region
          %s1682 = sand.u32 %s274, 1
          %s1683 = scalar_lea.sflag [#allocation13], %s1682
          %s1684 = sand.u32 %s274, 1
          %s1685 = smul.addr %s1684, 8
          %s1686 = scalar_lea.vmem [#allocation12], %s1685
          %1687 = dma.done %s1683, 128
        $region96: #{tpu_custom_call.1} parent=87 // pred_fallthru
          _
      $region88: #{tpu_custom_call.1} parent=5 // pred_fallthru
        _
    $region6: #{tpu_custom_call.1} parent=1 // loop_footer
      %s34 = sadd.s32 1, %s30
    $region7: #{tpu_custom_call.1} parent=1 // loop_footer_branch
      %29 = sbr.rel target = $region3
    $region8: #{tpu_custom_call.1} parent=1 // loop_exit
      _
    %1688 = vsyncpa [#allocation3], 1
    %s1689 = scalar_lea.sflag [#allocation3], 1
    %1690 = vsyncpa %s1689, 1
    %1691 = vsyncpa [#allocation6], 1
    %s1692 = scalar_lea.sflag [#allocation6], 1
    %1693 = vsyncpa %s1692, 1
    %1694 = vsyncpa [#allocation9], 1
    %1695 = vsyncpa [#allocation4], 1
    %s1696 = scalar_lea.sflag [#allocation4], 1
    %1697 = vsyncpa %s1696, 1
    %1698 = vsyncpa [#allocation13], 1
    %s1699 = scalar_lea.sflag [#allocation13], 1
    %1700 = vsyncpa %s1699, 1

</llo_original>
